<compile_context>
chip_gen: v7x
topology: tpu7x:2x2x1
jax: 0.10.0
libtpu: 0.0.40
codegen_flags: <defaults>
</compile_context>

<pallas_src>
import jax
import jax.numpy as jnp
from jax.experimental import pallas as pl
from jax.experimental.pallas import tpu as pltpu

# ----------------------------- config ---------------------------------------
B = 2            # batch
S = 8            # sequence length
H = 32           # hidden size (LaBSE uses 768; small synthetic value)
FF_I = 64        # FFN intermediate size
NUM_HEADS = 2
HEAD_DIM = H // NUM_HEADS
NUM_LAYERS = 2
VOCAB = 100
NUM_LABELS = 3
LN_EPS = 1e-12   # BERT layernorm eps (matches HF; below f32 resolution, noted in review)
SCALE = 1.0 / float(HEAD_DIM) ** 0.5

# Classifier dims: real (PyTorch module) vs zero-padded lane-dense versions.
CLF_REAL = [(H, 300), (300, 100), (100, 50), (50, NUM_LABELS)]
CLF_IN = [H, 384, 128, 128]      # padded input dims per classifier layer
CLF_OUT = [384, 128, 128, 128]   # padded output dims per classifier layer
CLF_ROW_OFF = [0]
for _d in CLF_IN[:-1]:
    CLF_ROW_OFF.append(CLF_ROW_OFF[-1] + _d)
CLF_SLAB_ROWS = sum(CLF_IN)      # 672
CLF_SLAB_COLS = max(CLF_OUT)     # 384
CLF_OUT_PAD = CLF_OUT[-1]        # 128

# Per-layer 1-row-vector slab row indices (slab shape (L, 8, 4H=128)):
#   row 0: [bq|bk|bv] (96 lanes)   row 1: bi (64)    row 2: bo (32)
#   row 3: g1 (32)  row 4: b1 (32)  row 5: bf (32)   row 6: g2 (32)  row 7: b2 (32)
(V_BQKV, V_BI, V_BO, V_G1, V_B1, V_BF, V_G2, V_B2) = range(8)
VEC_W = 4 * H


# --------------------------- in-kernel helpers -------------------------------
def _layernorm(x, g, b):
    m = jnp.mean(x, axis=-1, keepdims=True)
    v = jnp.mean((x - m) ** 2, axis=-1, keepdims=True)
    return (x - m) * jax.lax.rsqrt(v + LN_EPS) * g + b


def _softmax2d(x):
    # x: (rows, S). Exact division (review correctness note); exp uses the EUP slot.
    m = jnp.max(x, axis=-1, keepdims=True)
    e = jnp.exp(x - m)
    return e / jnp.sum(e, axis=-1, keepdims=True)


def _split_heads(proj, base):
    """Slice a head-contiguous block out of the fused projection and stack the heads
    on the leading (batch) axis: (B*S, 4H)[:, base:base+H] -> (NUM_HEADS*B, S, HEAD_DIM)."""
    parts = [
        proj[:, base + h * HEAD_DIM: base + (h + 1) * HEAD_DIM].reshape(B, S, HEAD_DIM)
        for h in range(NUM_HEADS)
    ]
    return jnp.concatenate(parts, axis=0)


def _merge_heads(ctx):
    """(NUM_HEADS*B, S, HEAD_DIM) -> (B*S, H): heads back onto the lane axis
    (both heads fit one 128-lane tile, so this is a single in-tile lane concat)."""
    parts = [ctx[h * B:(h + 1) * B].reshape(B * S, HEAD_DIM) for h in range(NUM_HEADS)]
    return jnp.concatenate(parts, axis=1)


def _encoder_layer(x, bias2d, w_attn, w_ffi, w_ffo, vec):
    """One BERT encoder layer on all B*S token rows at once.  x: (B*S, H) f32.

    w_attn: (H, 4H) bf16 = [Wq | Wk | Wv | Wo] (head-contiguous columns within Q/K/V)
    w_ffi:  (H, FF_I) bf16,  w_ffo: (FF_I, H) bf16,  vec: (8, 128) f32 per-layer vectors.
    """
    x_bf = x.astype(jnp.bfloat16)

    # Fused QKV projection: ONE MXU push over the full 128-lane weight slab; lanes
    # 96:128 (the Wo columns) of the result are ignored -- same MXU pass count either way.
    proj = (jnp.dot(x_bf, w_attn, preferred_element_type=jnp.float32)
            + vec[V_BQKV:V_BQKV + 1, :])                               # (B*S, 4H)

    q = _split_heads(proj, 0).astype(jnp.bfloat16)                     # (NH*B, S, HD)
    k = _split_heads(proj, H).astype(jnp.bfloat16)
    v = _split_heads(proj, 2 * H).astype(jnp.bfloat16)

    # One batched einsum over all (head, batch) pairs; K-transpose folded in.
    scores = jnp.einsum('bqd,bkd->bqk', q, k,
                        preferred_element_type=jnp.float32) * SCALE    # (NH*B, S, S)
    # Softmax on the 2-D (NH*B*S, S) view: batch + heads folded into sublanes.
    probs = _softmax2d(scores.reshape(NUM_HEADS * B * S, S) + bias2d)
    probs = probs.reshape(NUM_HEADS * B, S, S).astype(jnp.bfloat16)

    ctx = jnp.einsum('bqk,bkd->bqd', probs, v,
                     preferred_element_type=jnp.float32)               # (NH*B, S, HD)

    # Heads concatenated back onto lanes -> single full (H, H) Wo matmul.
    attn = (jnp.dot(_merge_heads(ctx).astype(jnp.bfloat16), w_attn[:, 3 * H:],
                    preferred_element_type=jnp.float32)
            + vec[V_BO:V_BO + 1, :H])

    h1 = _layernorm(x + attn, vec[V_G1:V_G1 + 1, :H], vec[V_B1:V_B1 + 1, :H])

    ff = (jnp.dot(h1.astype(jnp.bfloat16), w_ffi, preferred_element_type=jnp.float32)
          + vec[V_BI:V_BI + 1, :FF_I])
    ff = jax.nn.gelu(ff, approximate=True)
    ff = (jnp.dot(ff.astype(jnp.bfloat16), w_ffo, preferred_element_type=jnp.float32)
          + vec[V_BF:V_BF + 1, :H])

    return _layernorm(h1 + ff, vec[V_G2:V_G2 + 1, :H], vec[V_B2:V_B2 + 1, :H])


# ------------------------ fused Pallas kernel body ----------------------------
def fused_bert_kernel(emb_ref, mask_ref, w_attn_ref, w_ffi_ref, w_ffo_ref,
                      vecs_ref, glob_ref, clf_ref, out_ref):
    glob = glob_ref[...]                                               # (6, 384) f32

    # Embedding LayerNorm over all B*S token rows.
    x = _layernorm(emb_ref[...], glob[0:1, :H], glob[1:2, :H])         # (B*S, H)

    # Additive attention-mask bias, built once from the (B, S) mask and shared by every
    # layer & head; rows ordered (head, batch, query) to match the folded softmax view.
    neg = (1.0 - mask_ref[...]) * (-1e9)                               # (B, S)
    bias_b = jnp.broadcast_to(neg[:, None, :], (B, S, S)).reshape(B * S, S)
    bias2d = jnp.concatenate([bias_b] * NUM_HEADS, axis=0)             # (NH*B*S, S)

    # Encoder layers: static loop, stacked per-layer weight slabs resident in VMEM.
    for l in range(NUM_LAYERS):
        x = _encoder_layer(x, bias2d, w_attn_ref[l], w_ffi_ref[l], w_ffo_ref[l],
                           vecs_ref[l])

    # Classifier head on ALL B*S rows (M=16 costs the same MXU passes as M=2 and avoids
    # a strided CLS gather); zero-padded lane-dense widths -> real logits live in cols :3.
    h = x
    for i in range(len(CLF_IN)):
        r0 = CLF_ROW_OFF[i]
        w = clf_ref[r0:r0 + CLF_IN[i], 0:CLF_OUT[i]]                   # bf16 weight window
        b = glob[2 + i:3 + i, :CLF_OUT[i]]
        h = jnp.dot(h.astype(jnp.bfloat16), w,
                    preferred_element_type=jnp.float32) + b
        if i < len(CLF_IN) - 1:
            h = jnp.maximum(h, 0.0)
    out_ref[...] = h                                                   # (B*S, 128) f32


# ------------------------------ wrapper ---------------------------------------
def _cost_estimate(args):
    def mm(m, k, n):
        return 2 * m * k * n

    per_layer = (mm(B * S, H, 4 * H)                                   # fused QKV push
                 + 2 * NUM_HEADS * B * mm(S, HEAD_DIM, S)              # scores + PV
                 + mm(B * S, H, H)                                     # Wo
                 + mm(B * S, H, FF_I) + mm(B * S, FF_I, H))            # FFN
    clf = sum(mm(B * S, CLF_IN[i], CLF_OUT[i]) for i in range(len(CLF_IN)))
    flops = NUM_LAYERS * per_layer + clf
    transc = NUM_LAYERS * (NUM_HEADS * B * S * S + B * S * FF_I) + 3 * B * S
    byts = sum(int(a.size) * a.dtype.itemsize for a in args) + B * S * CLF_OUT_PAD * 4
    return pl.CostEstimate(flops=int(flops), transcendentals=int(transc),
                           bytes_accessed=int(byts))


def bert_classifier_forward(params, input_ids, attention_mask):
    # Embedding gather glue stays in plain JAX (word + position + token-type).
    emb = (params["word_emb"][input_ids]
           + params["pos_emb"][None, :, :]
           + params["type_emb"][None, None, :])
    emb2d = emb.reshape(B * S, H).astype(jnp.float32)
    mask_f = attention_mask.astype(jnp.float32)

    args = (emb2d, mask_f, params["w_attn"], params["w_ffn_in"], params["w_ffn_out"],
            params["layer_vecs"], params["global_vecs"], params["clf_w"])

    vmem = pl.BlockSpec(memory_space=pltpu.MemorySpace.VMEM)
    padded = pl.pallas_call(
        fused_bert_kernel,
        out_shape=jax.ShapeDtypeStruct((B * S, CLF_OUT_PAD), jnp.float32),
        in_specs=[vmem] * len(args),
        out_specs=vmem,
        cost_estimate=_cost_estimate(args),
    )(*args)

    # CLS pooling (rows b*S) + real-logit slice, outside the kernel.
    return padded[::S, :NUM_LABELS]


# ------------------------------- params ----------------------------------------
def init_params(key):
    keys = iter(jax.random.split(key, 32))

    def init(shape, scale=0.02):
        return (scale * jax.random.normal(next(keys), shape)).astype(jnp.float32)

    params = {
        "word_emb": init((VOCAB, H)),
        "pos_emb": init((S, H)),
        "type_emb": init((H,)),          # segment-0 token-type embedding
    }

    # Attention weight slab (L, H, 4H) bf16 = [Wq | Wk | Wv | Wo]; within Q/K/V the
    # HEAD_DIM-wide column groups are head-contiguous (head0 | head1).
    params["w_attn"] = jnp.stack(
        [init((H, 4 * H)) for _ in range(NUM_LAYERS)]).astype(jnp.bfloat16)
    params["w_ffn_in"] = jnp.stack(
        [init((H, FF_I)) for _ in range(NUM_LAYERS)]).astype(jnp.bfloat16)
    params["w_ffn_out"] = jnp.stack(
        [init((FF_I, H)) for _ in range(NUM_LAYERS)]).astype(jnp.bfloat16)

    # Per-layer 1-row vectors packed into one (L, 8, 128) f32 slab (biases 0, gammas 1).
    vecs = jnp.zeros((NUM_LAYERS, 8, VEC_W), jnp.float32)
    vecs = vecs.at[:, V_G1, :H].set(1.0)
    vecs = vecs.at[:, V_G2, :H].set(1.0)
    params["layer_vecs"] = vecs

    # Global vectors: row 0/1 = embedding-LN gamma/beta, rows 2..5 = classifier biases
    # (zero, padded to lane-dense widths).
    glob = jnp.zeros((6, CLF_SLAB_COLS), jnp.float32)
    glob = glob.at[0, :H].set(1.0)
    params["global_vecs"] = glob

    # Classifier weights: row-stacked single slab, zero-padded to lane-dense widths;
    # zero pads guarantee identical math to the un-padded module.
    clf = jnp.zeros((CLF_SLAB_ROWS, CLF_SLAB_COLS), jnp.float32)
    for (din, dout), r0 in zip(CLF_REAL, CLF_ROW_OFF):
        clf = clf.at[r0:r0 + din, :dout].set(init((din, dout), scale=0.05))
    params["clf_w"] = clf.astype(jnp.bfloat16)
    return params


# ------------------------------- main -----------------------------------------
if __name__ == "__main__":
    key = jax.random.PRNGKey(0)
    k_param, k_ids = jax.random.split(key)

    params = init_params(k_param)
    input_ids = jax.random.randint(k_ids, (B, S), 0, VOCAB, dtype=jnp.int32)
    attention_mask = jnp.ones((B, S), jnp.int32).at[1, 6:].set(0)  # pad tail of 2nd example

    fwd = jax.jit(bert_classifier_forward)
    logits = jax.block_until_ready(fwd(params, input_ids, attention_mask))

    assert logits.shape == (B, NUM_LABELS)
    assert bool(jnp.all(jnp.isfinite(logits)))
    print("KERNEL_OK")
</pallas_src>

<mosaic_0001>
module attributes {stable_mosaic.version = 11 : i64} {
  func.func @fused_bert_kernel(%arg0: memref<16x32xf32, #tpu.memory_space<vmem>>, %arg1: memref<2x8xf32, #tpu.memory_space<vmem>>, %arg2: memref<2x32x128xbf16, #tpu.memory_space<vmem>>, %arg3: memref<2x32x64xbf16, #tpu.memory_space<vmem>>, %arg4: memref<2x64x32xbf16, #tpu.memory_space<vmem>>, %arg5: memref<2x8x128xf32, #tpu.memory_space<vmem>>, %arg6: memref<6x384xf32, #tpu.memory_space<vmem>>, %arg7: memref<672x384xbf16, #tpu.memory_space<vmem>>, %arg8: memref<16x128xf32, #tpu.memory_space<vmem>>) attributes {dimension_semantics = [], scalar_prefetch = 0 : i64, scratch_operands = 0 : i64, tpu.core_type = #tpu.core_type<tc>} {
    %c0 = arith.constant 0 : index
    %c0_0 = arith.constant 0 : index
    %0 = vector.load %arg6[%c0, %c0_0] : memref<6x384xf32, #tpu.memory_space<vmem>>, vector<6x384xf32>
    %c0_1 = arith.constant 0 : index
    %c0_2 = arith.constant 0 : index
    %1 = vector.load %arg0[%c0_1, %c0_2] : memref<16x32xf32, #tpu.memory_space<vmem>>, vector<16x32xf32>
    %2 = vector.extract_strided_slice %0 {offsets = [0, 0], sizes = [1, 32], strides = [1, 1]} : vector<6x384xf32> to vector<1x32xf32>
    %3 = vector.extract_strided_slice %0 {offsets = [1, 0], sizes = [1, 32], strides = [1, 1]} : vector<6x384xf32> to vector<1x32xf32>
    %cst = arith.constant dense<0.000000e+00> : vector<16xf32>
    %4 = vector.multi_reduction <add>, %1, %cst [1] : vector<16x32xf32> to vector<16xf32>
    %5 = vector.shape_cast %4 : vector<16xf32> to vector<16x1xf32>
    %cst_3 = arith.constant 3.200000e+01 : f32
    %6 = vector.broadcast %cst_3 : f32 to vector<16x1xf32>
    %7 = arith.divf %5, %6 : vector<16x1xf32>
    %8 = vector.broadcast %7 : vector<16x1xf32> to vector<16x32xf32>
    %9 = arith.subf %1, %8 : vector<16x32xf32>
    %10 = arith.mulf %9, %9 : vector<16x32xf32>
    %cst_4 = arith.constant dense<0.000000e+00> : vector<16xf32>
    %11 = vector.multi_reduction <add>, %10, %cst_4 [1] : vector<16x32xf32> to vector<16xf32>
    %12 = vector.shape_cast %11 : vector<16xf32> to vector<16x1xf32>
    %cst_5 = arith.constant 3.200000e+01 : f32
    %13 = vector.broadcast %cst_5 : f32 to vector<16x1xf32>
    %14 = arith.divf %12, %13 : vector<16x1xf32>
    %15 = vector.broadcast %7 : vector<16x1xf32> to vector<16x32xf32>
    %16 = arith.subf %1, %15 : vector<16x32xf32>
    %cst_6 = arith.constant 9.99999996E-13 : f32
    %17 = vector.broadcast %cst_6 : f32 to vector<16x1xf32>
    %18 = arith.addf %14, %17 : vector<16x1xf32>
    %19 = math.rsqrt %18 : vector<16x1xf32>
    %20 = vector.broadcast %19 : vector<16x1xf32> to vector<16x32xf32>
    %21 = arith.mulf %16, %20 : vector<16x32xf32>
    %22 = vector.broadcast %2 : vector<1x32xf32> to vector<16x32xf32>
    %23 = arith.mulf %21, %22 : vector<16x32xf32>
    %24 = vector.broadcast %3 : vector<1x32xf32> to vector<16x32xf32>
    %25 = arith.addf %23, %24 : vector<16x32xf32>
    %c0_7 = arith.constant 0 : index
    %c0_8 = arith.constant 0 : index
    %26 = vector.load %arg1[%c0_7, %c0_8] : memref<2x8xf32, #tpu.memory_space<vmem>>, vector<2x8xf32>
    %cst_9 = arith.constant 1.000000e+00 : f32
    %27 = vector.broadcast %cst_9 : f32 to vector<2x8xf32>
    %28 = arith.subf %27, %26 : vector<2x8xf32>
    %cst_10 = arith.constant -1.000000e+09 : f32
    %29 = vector.broadcast %cst_10 : f32 to vector<2x8xf32>
    %30 = arith.mulf %28, %29 : vector<2x8xf32>
    %31 = vector.shape_cast %30 : vector<2x8xf32> to vector<2x1x8xf32>
    %32 = vector.shape_cast %31 : vector<2x1x8xf32> to vector<2x1x8xf32>
    %33 = vector.broadcast %32 : vector<2x1x8xf32> to vector<2x8x8xf32>
    %34 = vector.shape_cast %33 : vector<2x8x8xf32> to vector<16x8xf32>
    %35 = tpu.concatenate %34, %34 in 0 : vector<16x8xf32>, vector<16x8xf32> -> vector<32x8xf32>
    %c0_11 = arith.constant 0 : index
    %c0_12 = arith.constant 0 : index
    %c0_13 = arith.constant 0 : index
    %36 = vector.load %arg2[%c0_11, %c0_12, %c0_13] : memref<2x32x128xbf16, #tpu.memory_space<vmem>>, vector<1x32x128xbf16>
    %37 = vector.shape_cast %36 : vector<1x32x128xbf16> to vector<32x128xbf16>
    %c0_14 = arith.constant 0 : index
    %c0_15 = arith.constant 0 : index
    %c0_16 = arith.constant 0 : index
    %38 = vector.load %arg3[%c0_14, %c0_15, %c0_16] : memref<2x32x64xbf16, #tpu.memory_space<vmem>>, vector<1x32x64xbf16>
    %39 = vector.shape_cast %38 : vector<1x32x64xbf16> to vector<32x64xbf16>
    %c0_17 = arith.constant 0 : index
    %c0_18 = arith.constant 0 : index
    %c0_19 = arith.constant 0 : index
    %40 = vector.load %arg4[%c0_17, %c0_18, %c0_19] : memref<2x64x32xbf16, #tpu.memory_space<vmem>>, vector<1x64x32xbf16>
    %41 = vector.shape_cast %40 : vector<1x64x32xbf16> to vector<64x32xbf16>
    %c0_20 = arith.constant 0 : index
    %c0_21 = arith.constant 0 : index
    %c0_22 = arith.constant 0 : index
    %42 = vector.load %arg5[%c0_20, %c0_21, %c0_22] : memref<2x8x128xf32, #tpu.memory_space<vmem>>, vector<1x8x128xf32>
    %43 = vector.shape_cast %42 : vector<1x8x128xf32> to vector<8x128xf32>
    %44 = arith.truncf %25 : vector<16x32xf32> to vector<16x32xbf16>
    %cst_23 = arith.constant dense<0.000000e+00> : vector<16x128xf32>
    %45 = tpu.matmul %44, %37, %cst_23 {dimension_numbers = #tpu.dot_dimension_numbers<[1], [0], [0], [1], [0, 0, 1, 1], [], []>} : vector<16x32xbf16>, vector<32x128xbf16>, vector<16x128xf32> -> vector<16x128xf32>
    %46 = vector.extract_strided_slice %43 {offsets = [0, 0], sizes = [1, 128], strides = [1, 1]} : vector<8x128xf32> to vector<1x128xf32>
    %47 = vector.broadcast %46 : vector<1x128xf32> to vector<16x128xf32>
    %48 = arith.addf %45, %47 : vector<16x128xf32>
    %49 = vector.extract_strided_slice %48 {offsets = [0, 0], sizes = [16, 16], strides = [1, 1]} : vector<16x128xf32> to vector<16x16xf32>
    %50 = vector.shape_cast %49 : vector<16x16xf32> to vector<2x8x16xf32>
    %51 = vector.extract_strided_slice %48 {offsets = [0, 16], sizes = [16, 16], strides = [1, 1]} : vector<16x128xf32> to vector<16x16xf32>
    %52 = vector.shape_cast %51 : vector<16x16xf32> to vector<2x8x16xf32>
    %53 = tpu.concatenate %50, %52 in 0 : vector<2x8x16xf32>, vector<2x8x16xf32> -> vector<4x8x16xf32>
    %54 = arith.truncf %53 : vector<4x8x16xf32> to vector<4x8x16xbf16>
    %55 = vector.extract_strided_slice %48 {offsets = [0, 32], sizes = [16, 16], strides = [1, 1]} : vector<16x128xf32> to vector<16x16xf32>
    %56 = vector.shape_cast %55 : vector<16x16xf32> to vector<2x8x16xf32>
    %57 = vector.extract_strided_slice %48 {offsets = [0, 48], sizes = [16, 16], strides = [1, 1]} : vector<16x128xf32> to vector<16x16xf32>
    %58 = vector.shape_cast %57 : vector<16x16xf32> to vector<2x8x16xf32>
    %59 = tpu.concatenate %56, %58 in 0 : vector<2x8x16xf32>, vector<2x8x16xf32> -> vector<4x8x16xf32>
    %60 = arith.truncf %59 : vector<4x8x16xf32> to vector<4x8x16xbf16>
    %61 = vector.extract_strided_slice %48 {offsets = [0, 64], sizes = [16, 16], strides = [1, 1]} : vector<16x128xf32> to vector<16x16xf32>
    %62 = vector.shape_cast %61 : vector<16x16xf32> to vector<2x8x16xf32>
    %63 = vector.extract_strided_slice %48 {offsets = [0, 80], sizes = [16, 16], strides = [1, 1]} : vector<16x128xf32> to vector<16x16xf32>
    %64 = vector.shape_cast %63 : vector<16x16xf32> to vector<2x8x16xf32>
    %65 = tpu.concatenate %62, %64 in 0 : vector<2x8x16xf32>, vector<2x8x16xf32> -> vector<4x8x16xf32>
    %66 = arith.truncf %65 : vector<4x8x16xf32> to vector<4x8x16xbf16>
    "tpu.trace_start"() <{level = 10 : i32, message = "bqd,bkd->bqk"}> : () -> ()
    %cst_24 = arith.constant dense<0.000000e+00> : vector<4x8x8xf32>
    %67 = tpu.matmul %54, %60, %cst_24 {dimension_numbers = #tpu.dot_dimension_numbers<[2], [2], [1], [1], [0, 0, 0, 1, 1, 1], [0], [0]>} : vector<4x8x16xbf16>, vector<4x8x16xbf16>, vector<4x8x8xf32> -> vector<4x8x8xf32>
    "tpu.trace_stop"() : () -> ()
    %cst_25 = arith.constant 2.500000e-01 : f32
    %68 = vector.broadcast %cst_25 : f32 to vector<4x8x8xf32>
    %69 = arith.mulf %67, %68 : vector<4x8x8xf32>
    %70 = vector.shape_cast %69 : vector<4x8x8xf32> to vector<32x8xf32>
    %71 = arith.addf %70, %35 : vector<32x8xf32>
    %cst_26 = arith.constant dense<0xFF800000> : vector<32xf32>
    %72 = vector.multi_reduction <maximumf>, %71, %cst_26 [1] : vector<32x8xf32> to vector<32xf32>
    %73 = vector.shape_cast %72 : vector<32xf32> to vector<32x1xf32>
    %74 = vector.broadcast %73 : vector<32x1xf32> to vector<32x8xf32>
    %75 = arith.subf %71, %74 : vector<32x8xf32>
    %76 = math.exp %75 : vector<32x8xf32>
    %cst_27 = arith.constant dense<0.000000e+00> : vector<32xf32>
    %77 = vector.multi_reduction <add>, %76, %cst_27 [1] : vector<32x8xf32> to vector<32xf32>
    %78 = vector.shape_cast %77 : vector<32xf32> to vector<32x1xf32>
    %79 = vector.broadcast %78 : vector<32x1xf32> to vector<32x8xf32>
    %80 = arith.divf %76, %79 : vector<32x8xf32>
    %81 = vector.shape_cast %80 : vector<32x8xf32> to vector<4x8x8xf32>
    %82 = arith.truncf %81 : vector<4x8x8xf32> to vector<4x8x8xbf16>
    "tpu.trace_start"() <{level = 10 : i32, message = "bqk,bkd->bqd"}> : () -> ()
    %cst_28 = arith.constant dense<0.000000e+00> : vector<4x8x16xf32>
    %83 = tpu.matmul %82, %66, %cst_28 {dimension_numbers = #tpu.dot_dimension_numbers<[2], [1], [1], [2], [0, 0, 0, 1, 1, 2], [0], [0]>} : vector<4x8x8xbf16>, vector<4x8x16xbf16>, vector<4x8x16xf32> -> vector<4x8x16xf32>
    "tpu.trace_stop"() : () -> ()
    %84 = vector.extract_strided_slice %83 {offsets = [0, 0, 0], sizes = [2, 8, 16], strides = [1, 1, 1]} : vector<4x8x16xf32> to vector<2x8x16xf32>
    %85 = vector.shape_cast %84 : vector<2x8x16xf32> to vector<16x16xf32>
    %86 = vector.extract_strided_slice %83 {offsets = [2, 0, 0], sizes = [2, 8, 16], strides = [1, 1, 1]} : vector<4x8x16xf32> to vector<2x8x16xf32>
    %87 = vector.shape_cast %86 : vector<2x8x16xf32> to vector<16x16xf32>
    %88 = tpu.concatenate %85, %87 in 1 : vector<16x16xf32>, vector<16x16xf32> -> vector<16x32xf32>
    %89 = arith.truncf %88 : vector<16x32xf32> to vector<16x32xbf16>
    %90 = vector.extract_strided_slice %37 {offsets = [0, 96], sizes = [32, 32], strides = [1, 1]} : vector<32x128xbf16> to vector<32x32xbf16>
    %cst_29 = arith.constant dense<0.000000e+00> : vector<16x32xf32>
    %91 = tpu.matmul %89, %90, %cst_29 {dimension_numbers = #tpu.dot_dimension_numbers<[1], [0], [0], [1], [0, 0, 1, 1], [], []>} : vector<16x32xbf16>, vector<32x32xbf16>, vector<16x32xf32> -> vector<16x32xf32>
    %92 = vector.extract_strided_slice %43 {offsets = [2, 0], sizes = [1, 32], strides = [1, 1]} : vector<8x128xf32> to vector<1x32xf32>
    %93 = vector.broadcast %92 : vector<1x32xf32> to vector<16x32xf32>
    %94 = arith.addf %91, %93 : vector<16x32xf32>
    %95 = arith.addf %25, %94 : vector<16x32xf32>
    %96 = vector.extract_strided_slice %43 {offsets = [3, 0], sizes = [1, 32], strides = [1, 1]} : vector<8x128xf32> to vector<1x32xf32>
    %97 = vector.extract_strided_slice %43 {offsets = [4, 0], sizes = [1, 32], strides = [1, 1]} : vector<8x128xf32> to vector<1x32xf32>
    %cst_30 = arith.constant dense<0.000000e+00> : vector<16xf32>
    %98 = vector.multi_reduction <add>, %95, %cst_30 [1] : vector<16x32xf32> to vector<16xf32>
    %99 = vector.shape_cast %98 : vector<16xf32> to vector<16x1xf32>
    %cst_31 = arith.constant 3.200000e+01 : f32
    %100 = vector.broadcast %cst_31 : f32 to vector<16x1xf32>
    %101 = arith.divf %99, %100 : vector<16x1xf32>
    %102 = vector.broadcast %101 : vector<16x1xf32> to vector<16x32xf32>
    %103 = arith.subf %95, %102 : vector<16x32xf32>
    %104 = arith.mulf %103, %103 : vector<16x32xf32>
    %cst_32 = arith.constant dense<0.000000e+00> : vector<16xf32>
    %105 = vector.multi_reduction <add>, %104, %cst_32 [1] : vector<16x32xf32> to vector<16xf32>
    %106 = vector.shape_cast %105 : vector<16xf32> to vector<16x1xf32>
    %cst_33 = arith.constant 3.200000e+01 : f32
    %107 = vector.broadcast %cst_33 : f32 to vector<16x1xf32>
    %108 = arith.divf %106, %107 : vector<16x1xf32>
    %109 = vector.broadcast %101 : vector<16x1xf32> to vector<16x32xf32>
    %110 = arith.subf %95, %109 : vector<16x32xf32>
    %cst_34 = arith.constant 9.99999996E-13 : f32
    %111 = vector.broadcast %cst_34 : f32 to vector<16x1xf32>
    %112 = arith.addf %108, %111 : vector<16x1xf32>
    %113 = math.rsqrt %112 : vector<16x1xf32>
    %114 = vector.broadcast %113 : vector<16x1xf32> to vector<16x32xf32>
    %115 = arith.mulf %110, %114 : vector<16x32xf32>
    %116 = vector.broadcast %96 : vector<1x32xf32> to vector<16x32xf32>
    %117 = arith.mulf %115, %116 : vector<16x32xf32>
    %118 = vector.broadcast %97 : vector<1x32xf32> to vector<16x32xf32>
    %119 = arith.addf %117, %118 : vector<16x32xf32>
    %120 = arith.truncf %119 : vector<16x32xf32> to vector<16x32xbf16>
    %cst_35 = arith.constant dense<0.000000e+00> : vector<16x64xf32>
    %121 = tpu.matmul %120, %39, %cst_35 {dimension_numbers = #tpu.dot_dimension_numbers<[1], [0], [0], [1], [0, 0, 1, 1], [], []>} : vector<16x32xbf16>, vector<32x64xbf16>, vector<16x64xf32> -> vector<16x64xf32>
    %122 = vector.extract_strided_slice %43 {offsets = [1, 0], sizes = [1, 64], strides = [1, 1]} : vector<8x128xf32> to vector<1x64xf32>
    %123 = vector.broadcast %122 : vector<1x64xf32> to vector<16x64xf32>
    %124 = arith.addf %121, %123 : vector<16x64xf32>
    %125 = arith.mulf %124, %124 : vector<16x64xf32>
    %126 = arith.mulf %124, %125 : vector<16x64xf32>
    %cst_36 = arith.constant 4.471500e-02 : f32
    %127 = vector.broadcast %cst_36 : f32 to vector<16x64xf32>
    %128 = arith.mulf %127, %126 : vector<16x64xf32>
    %129 = arith.addf %124, %128 : vector<16x64xf32>
    %cst_37 = arith.constant 0.797884583 : f32
    %130 = vector.broadcast %cst_37 : f32 to vector<16x64xf32>
    %131 = arith.mulf %130, %129 : vector<16x64xf32>
    %132 = math.tanh %131 : vector<16x64xf32>
    %cst_38 = arith.constant 1.000000e+00 : f32
    %133 = vector.broadcast %cst_38 : f32 to vector<16x64xf32>
    %134 = arith.addf %133, %132 : vector<16x64xf32>
    %cst_39 = arith.constant 5.000000e-01 : f32
    %135 = vector.broadcast %cst_39 : f32 to vector<16x64xf32>
    %136 = arith.mulf %135, %134 : vector<16x64xf32>
    %137 = arith.mulf %124, %136 : vector<16x64xf32>
    %138 = arith.truncf %137 : vector<16x64xf32> to vector<16x64xbf16>
    %cst_40 = arith.constant dense<0.000000e+00> : vector<16x32xf32>
    %139 = tpu.matmul %138, %41, %cst_40 {dimension_numbers = #tpu.dot_dimension_numbers<[1], [0], [0], [1], [0, 0, 1, 1], [], []>} : vector<16x64xbf16>, vector<64x32xbf16>, vector<16x32xf32> -> vector<16x32xf32>
    %140 = vector.extract_strided_slice %43 {offsets = [5, 0], sizes = [1, 32], strides = [1, 1]} : vector<8x128xf32> to vector<1x32xf32>
    %141 = vector.broadcast %140 : vector<1x32xf32> to vector<16x32xf32>
    %142 = arith.addf %139, %141 : vector<16x32xf32>
    %143 = arith.addf %119, %142 : vector<16x32xf32>
    %144 = vector.extract_strided_slice %43 {offsets = [6, 0], sizes = [1, 32], strides = [1, 1]} : vector<8x128xf32> to vector<1x32xf32>
    %145 = vector.extract_strided_slice %43 {offsets = [7, 0], sizes = [1, 32], strides = [1, 1]} : vector<8x128xf32> to vector<1x32xf32>
    %cst_41 = arith.constant dense<0.000000e+00> : vector<16xf32>
    %146 = vector.multi_reduction <add>, %143, %cst_41 [1] : vector<16x32xf32> to vector<16xf32>
    %147 = vector.shape_cast %146 : vector<16xf32> to vector<16x1xf32>
    %cst_42 = arith.constant 3.200000e+01 : f32
    %148 = vector.broadcast %cst_42 : f32 to vector<16x1xf32>
    %149 = arith.divf %147, %148 : vector<16x1xf32>
    %150 = vector.broadcast %149 : vector<16x1xf32> to vector<16x32xf32>
    %151 = arith.subf %143, %150 : vector<16x32xf32>
    %152 = arith.mulf %151, %151 : vector<16x32xf32>
    %cst_43 = arith.constant dense<0.000000e+00> : vector<16xf32>
    %153 = vector.multi_reduction <add>, %152, %cst_43 [1] : vector<16x32xf32> to vector<16xf32>
    %154 = vector.shape_cast %153 : vector<16xf32> to vector<16x1xf32>
    %cst_44 = arith.constant 3.200000e+01 : f32
    %155 = vector.broadcast %cst_44 : f32 to vector<16x1xf32>
    %156 = arith.divf %154, %155 : vector<16x1xf32>
    %157 = vector.broadcast %149 : vector<16x1xf32> to vector<16x32xf32>
    %158 = arith.subf %143, %157 : vector<16x32xf32>
    %cst_45 = arith.constant 9.99999996E-13 : f32
    %159 = vector.broadcast %cst_45 : f32 to vector<16x1xf32>
    %160 = arith.addf %156, %159 : vector<16x1xf32>
    %161 = math.rsqrt %160 : vector<16x1xf32>
    %162 = vector.broadcast %161 : vector<16x1xf32> to vector<16x32xf32>
    %163 = arith.mulf %158, %162 : vector<16x32xf32>
    %164 = vector.broadcast %144 : vector<1x32xf32> to vector<16x32xf32>
    %165 = arith.mulf %163, %164 : vector<16x32xf32>
    %166 = vector.broadcast %145 : vector<1x32xf32> to vector<16x32xf32>
    %167 = arith.addf %165, %166 : vector<16x32xf32>
    %c1 = arith.constant 1 : index
    %c0_46 = arith.constant 0 : index
    %c0_47 = arith.constant 0 : index
    %168 = vector.load %arg2[%c1, %c0_46, %c0_47] : memref<2x32x128xbf16, #tpu.memory_space<vmem>>, vector<1x32x128xbf16>
    %169 = vector.shape_cast %168 : vector<1x32x128xbf16> to vector<32x128xbf16>
    %c1_48 = arith.constant 1 : index
    %c0_49 = arith.constant 0 : index
    %c0_50 = arith.constant 0 : index
    %170 = vector.load %arg3[%c1_48, %c0_49, %c0_50] : memref<2x32x64xbf16, #tpu.memory_space<vmem>>, vector<1x32x64xbf16>
    %171 = vector.shape_cast %170 : vector<1x32x64xbf16> to vector<32x64xbf16>
    %c1_51 = arith.constant 1 : index
    %c0_52 = arith.constant 0 : index
    %c0_53 = arith.constant 0 : index
    %172 = vector.load %arg4[%c1_51, %c0_52, %c0_53] : memref<2x64x32xbf16, #tpu.memory_space<vmem>>, vector<1x64x32xbf16>
    %173 = vector.shape_cast %172 : vector<1x64x32xbf16> to vector<64x32xbf16>
    %c1_54 = arith.constant 1 : index
    %c0_55 = arith.constant 0 : index
    %c0_56 = arith.constant 0 : index
    %174 = vector.load %arg5[%c1_54, %c0_55, %c0_56] : memref<2x8x128xf32, #tpu.memory_space<vmem>>, vector<1x8x128xf32>
    %175 = vector.shape_cast %174 : vector<1x8x128xf32> to vector<8x128xf32>
    %176 = arith.truncf %167 : vector<16x32xf32> to vector<16x32xbf16>
    %cst_57 = arith.constant dense<0.000000e+00> : vector<16x128xf32>
    %177 = tpu.matmul %176, %169, %cst_57 {dimension_numbers = #tpu.dot_dimension_numbers<[1], [0], [0], [1], [0, 0, 1, 1], [], []>} : vector<16x32xbf16>, vector<32x128xbf16>, vector<16x128xf32> -> vector<16x128xf32>
    %178 = vector.extract_strided_slice %175 {offsets = [0, 0], sizes = [1, 128], strides = [1, 1]} : vector<8x128xf32> to vector<1x128xf32>
    %179 = vector.broadcast %178 : vector<1x128xf32> to vector<16x128xf32>
    %180 = arith.addf %177, %179 : vector<16x128xf32>
    %181 = vector.extract_strided_slice %180 {offsets = [0, 0], sizes = [16, 16], strides = [1, 1]} : vector<16x128xf32> to vector<16x16xf32>
    %182 = vector.shape_cast %181 : vector<16x16xf32> to vector<2x8x16xf32>
    %183 = vector.extract_strided_slice %180 {offsets = [0, 16], sizes = [16, 16], strides = [1, 1]} : vector<16x128xf32> to vector<16x16xf32>
    %184 = vector.shape_cast %183 : vector<16x16xf32> to vector<2x8x16xf32>
    %185 = tpu.concatenate %182, %184 in 0 : vector<2x8x16xf32>, vector<2x8x16xf32> -> vector<4x8x16xf32>
    %186 = arith.truncf %185 : vector<4x8x16xf32> to vector<4x8x16xbf16>
    %187 = vector.extract_strided_slice %180 {offsets = [0, 32], sizes = [16, 16], strides = [1, 1]} : vector<16x128xf32> to vector<16x16xf32>
    %188 = vector.shape_cast %187 : vector<16x16xf32> to vector<2x8x16xf32>
    %189 = vector.extract_strided_slice %180 {offsets = [0, 48], sizes = [16, 16], strides = [1, 1]} : vector<16x128xf32> to vector<16x16xf32>
    %190 = vector.shape_cast %189 : vector<16x16xf32> to vector<2x8x16xf32>
    %191 = tpu.concatenate %188, %190 in 0 : vector<2x8x16xf32>, vector<2x8x16xf32> -> vector<4x8x16xf32>
    %192 = arith.truncf %191 : vector<4x8x16xf32> to vector<4x8x16xbf16>
    %193 = vector.extract_strided_slice %180 {offsets = [0, 64], sizes = [16, 16], strides = [1, 1]} : vector<16x128xf32> to vector<16x16xf32>
    %194 = vector.shape_cast %193 : vector<16x16xf32> to vector<2x8x16xf32>
    %195 = vector.extract_strided_slice %180 {offsets = [0, 80], sizes = [16, 16], strides = [1, 1]} : vector<16x128xf32> to vector<16x16xf32>
    %196 = vector.shape_cast %195 : vector<16x16xf32> to vector<2x8x16xf32>
    %197 = tpu.concatenate %194, %196 in 0 : vector<2x8x16xf32>, vector<2x8x16xf32> -> vector<4x8x16xf32>
    %198 = arith.truncf %197 : vector<4x8x16xf32> to vector<4x8x16xbf16>
    "tpu.trace_start"() <{level = 10 : i32, message = "bqd,bkd->bqk"}> : () -> ()
    %cst_58 = arith.constant dense<0.000000e+00> : vector<4x8x8xf32>
    %199 = tpu.matmul %186, %192, %cst_58 {dimension_numbers = #tpu.dot_dimension_numbers<[2], [2], [1], [1], [0, 0, 0, 1, 1, 1], [0], [0]>} : vector<4x8x16xbf16>, vector<4x8x16xbf16>, vector<4x8x8xf32> -> vector<4x8x8xf32>
    "tpu.trace_stop"() : () -> ()
    %cst_59 = arith.constant 2.500000e-01 : f32
    %200 = vector.broadcast %cst_59 : f32 to vector<4x8x8xf32>
    %201 = arith.mulf %199, %200 : vector<4x8x8xf32>
    %202 = vector.shape_cast %201 : vector<4x8x8xf32> to vector<32x8xf32>
    %203 = arith.addf %202, %35 : vector<32x8xf32>
    %cst_60 = arith.constant dense<0xFF800000> : vector<32xf32>
    %204 = vector.multi_reduction <maximumf>, %203, %cst_60 [1] : vector<32x8xf32> to vector<32xf32>
    %205 = vector.shape_cast %204 : vector<32xf32> to vector<32x1xf32>
    %206 = vector.broadcast %205 : vector<32x1xf32> to vector<32x8xf32>
    %207 = arith.subf %203, %206 : vector<32x8xf32>
    %208 = math.exp %207 : vector<32x8xf32>
    %cst_61 = arith.constant dense<0.000000e+00> : vector<32xf32>
    %209 = vector.multi_reduction <add>, %208, %cst_61 [1] : vector<32x8xf32> to vector<32xf32>
    %210 = vector.shape_cast %209 : vector<32xf32> to vector<32x1xf32>
    %211 = vector.broadcast %210 : vector<32x1xf32> to vector<32x8xf32>
    %212 = arith.divf %208, %211 : vector<32x8xf32>
    %213 = vector.shape_cast %212 : vector<32x8xf32> to vector<4x8x8xf32>
    %214 = arith.truncf %213 : vector<4x8x8xf32> to vector<4x8x8xbf16>
    "tpu.trace_start"() <{level = 10 : i32, message = "bqk,bkd->bqd"}> : () -> ()
    %cst_62 = arith.constant dense<0.000000e+00> : vector<4x8x16xf32>
    %215 = tpu.matmul %214, %198, %cst_62 {dimension_numbers = #tpu.dot_dimension_numbers<[2], [1], [1], [2], [0, 0, 0, 1, 1, 2], [0], [0]>} : vector<4x8x8xbf16>, vector<4x8x16xbf16>, vector<4x8x16xf32> -> vector<4x8x16xf32>
    "tpu.trace_stop"() : () -> ()
    %216 = vector.extract_strided_slice %215 {offsets = [0, 0, 0], sizes = [2, 8, 16], strides = [1, 1, 1]} : vector<4x8x16xf32> to vector<2x8x16xf32>
    %217 = vector.shape_cast %216 : vector<2x8x16xf32> to vector<16x16xf32>
    %218 = vector.extract_strided_slice %215 {offsets = [2, 0, 0], sizes = [2, 8, 16], strides = [1, 1, 1]} : vector<4x8x16xf32> to vector<2x8x16xf32>
    %219 = vector.shape_cast %218 : vector<2x8x16xf32> to vector<16x16xf32>
    %220 = tpu.concatenate %217, %219 in 1 : vector<16x16xf32>, vector<16x16xf32> -> vector<16x32xf32>
    %221 = arith.truncf %220 : vector<16x32xf32> to vector<16x32xbf16>
    %222 = vector.extract_strided_slice %169 {offsets = [0, 96], sizes = [32, 32], strides = [1, 1]} : vector<32x128xbf16> to vector<32x32xbf16>
    %cst_63 = arith.constant dense<0.000000e+00> : vector<16x32xf32>
    %223 = tpu.matmul %221, %222, %cst_63 {dimension_numbers = #tpu.dot_dimension_numbers<[1], [0], [0], [1], [0, 0, 1, 1], [], []>} : vector<16x32xbf16>, vector<32x32xbf16>, vector<16x32xf32> -> vector<16x32xf32>
    %224 = vector.extract_strided_slice %175 {offsets = [2, 0], sizes = [1, 32], strides = [1, 1]} : vector<8x128xf32> to vector<1x32xf32>
    %225 = vector.broadcast %224 : vector<1x32xf32> to vector<16x32xf32>
    %226 = arith.addf %223, %225 : vector<16x32xf32>
    %227 = arith.addf %167, %226 : vector<16x32xf32>
    %228 = vector.extract_strided_slice %175 {offsets = [3, 0], sizes = [1, 32], strides = [1, 1]} : vector<8x128xf32> to vector<1x32xf32>
    %229 = vector.extract_strided_slice %175 {offsets = [4, 0], sizes = [1, 32], strides = [1, 1]} : vector<8x128xf32> to vector<1x32xf32>
    %cst_64 = arith.constant dense<0.000000e+00> : vector<16xf32>
    %230 = vector.multi_reduction <add>, %227, %cst_64 [1] : vector<16x32xf32> to vector<16xf32>
    %231 = vector.shape_cast %230 : vector<16xf32> to vector<16x1xf32>
    %cst_65 = arith.constant 3.200000e+01 : f32
    %232 = vector.broadcast %cst_65 : f32 to vector<16x1xf32>
    %233 = arith.divf %231, %232 : vector<16x1xf32>
    %234 = vector.broadcast %233 : vector<16x1xf32> to vector<16x32xf32>
    %235 = arith.subf %227, %234 : vector<16x32xf32>
    %236 = arith.mulf %235, %235 : vector<16x32xf32>
    %cst_66 = arith.constant dense<0.000000e+00> : vector<16xf32>
    %237 = vector.multi_reduction <add>, %236, %cst_66 [1] : vector<16x32xf32> to vector<16xf32>
    %238 = vector.shape_cast %237 : vector<16xf32> to vector<16x1xf32>
    %cst_67 = arith.constant 3.200000e+01 : f32
    %239 = vector.broadcast %cst_67 : f32 to vector<16x1xf32>
    %240 = arith.divf %238, %239 : vector<16x1xf32>
    %241 = vector.broadcast %233 : vector<16x1xf32> to vector<16x32xf32>
    %242 = arith.subf %227, %241 : vector<16x32xf32>
    %cst_68 = arith.constant 9.99999996E-13 : f32
    %243 = vector.broadcast %cst_68 : f32 to vector<16x1xf32>
    %244 = arith.addf %240, %243 : vector<16x1xf32>
    %245 = math.rsqrt %244 : vector<16x1xf32>
    %246 = vector.broadcast %245 : vector<16x1xf32> to vector<16x32xf32>
    %247 = arith.mulf %242, %246 : vector<16x32xf32>
    %248 = vector.broadcast %228 : vector<1x32xf32> to vector<16x32xf32>
    %249 = arith.mulf %247, %248 : vector<16x32xf32>
    %250 = vector.broadcast %229 : vector<1x32xf32> to vector<16x32xf32>
    %251 = arith.addf %249, %250 : vector<16x32xf32>
    %252 = arith.truncf %251 : vector<16x32xf32> to vector<16x32xbf16>
    %cst_69 = arith.constant dense<0.000000e+00> : vector<16x64xf32>
    %253 = tpu.matmul %252, %171, %cst_69 {dimension_numbers = #tpu.dot_dimension_numbers<[1], [0], [0], [1], [0, 0, 1, 1], [], []>} : vector<16x32xbf16>, vector<32x64xbf16>, vector<16x64xf32> -> vector<16x64xf32>
    %254 = vector.extract_strided_slice %175 {offsets = [1, 0], sizes = [1, 64], strides = [1, 1]} : vector<8x128xf32> to vector<1x64xf32>
    %255 = vector.broadcast %254 : vector<1x64xf32> to vector<16x64xf32>
    %256 = arith.addf %253, %255 : vector<16x64xf32>
    %257 = arith.mulf %256, %256 : vector<16x64xf32>
    %258 = arith.mulf %256, %257 : vector<16x64xf32>
    %cst_70 = arith.constant 4.471500e-02 : f32
    %259 = vector.broadcast %cst_70 : f32 to vector<16x64xf32>
    %260 = arith.mulf %259, %258 : vector<16x64xf32>
    %261 = arith.addf %256, %260 : vector<16x64xf32>
    %cst_71 = arith.constant 0.797884583 : f32
    %262 = vector.broadcast %cst_71 : f32 to vector<16x64xf32>
    %263 = arith.mulf %262, %261 : vector<16x64xf32>
    %264 = math.tanh %263 : vector<16x64xf32>
    %cst_72 = arith.constant 1.000000e+00 : f32
    %265 = vector.broadcast %cst_72 : f32 to vector<16x64xf32>
    %266 = arith.addf %265, %264 : vector<16x64xf32>
    %cst_73 = arith.constant 5.000000e-01 : f32
    %267 = vector.broadcast %cst_73 : f32 to vector<16x64xf32>
    %268 = arith.mulf %267, %266 : vector<16x64xf32>
    %269 = arith.mulf %256, %268 : vector<16x64xf32>
    %270 = arith.truncf %269 : vector<16x64xf32> to vector<16x64xbf16>
    %cst_74 = arith.constant dense<0.000000e+00> : vector<16x32xf32>
    %271 = tpu.matmul %270, %173, %cst_74 {dimension_numbers = #tpu.dot_dimension_numbers<[1], [0], [0], [1], [0, 0, 1, 1], [], []>} : vector<16x64xbf16>, vector<64x32xbf16>, vector<16x32xf32> -> vector<16x32xf32>
    %272 = vector.extract_strided_slice %175 {offsets = [5, 0], sizes = [1, 32], strides = [1, 1]} : vector<8x128xf32> to vector<1x32xf32>
    %273 = vector.broadcast %272 : vector<1x32xf32> to vector<16x32xf32>
    %274 = arith.addf %271, %273 : vector<16x32xf32>
    %275 = arith.addf %251, %274 : vector<16x32xf32>
    %276 = vector.extract_strided_slice %175 {offsets = [6, 0], sizes = [1, 32], strides = [1, 1]} : vector<8x128xf32> to vector<1x32xf32>
    %277 = vector.extract_strided_slice %175 {offsets = [7, 0], sizes = [1, 32], strides = [1, 1]} : vector<8x128xf32> to vector<1x32xf32>
    %cst_75 = arith.constant dense<0.000000e+00> : vector<16xf32>
    %278 = vector.multi_reduction <add>, %275, %cst_75 [1] : vector<16x32xf32> to vector<16xf32>
    %279 = vector.shape_cast %278 : vector<16xf32> to vector<16x1xf32>
    %cst_76 = arith.constant 3.200000e+01 : f32
    %280 = vector.broadcast %cst_76 : f32 to vector<16x1xf32>
    %281 = arith.divf %279, %280 : vector<16x1xf32>
    %282 = vector.broadcast %281 : vector<16x1xf32> to vector<16x32xf32>
    %283 = arith.subf %275, %282 : vector<16x32xf32>
    %284 = arith.mulf %283, %283 : vector<16x32xf32>
    %cst_77 = arith.constant dense<0.000000e+00> : vector<16xf32>
    %285 = vector.multi_reduction <add>, %284, %cst_77 [1] : vector<16x32xf32> to vector<16xf32>
    %286 = vector.shape_cast %285 : vector<16xf32> to vector<16x1xf32>
    %cst_78 = arith.constant 3.200000e+01 : f32
    %287 = vector.broadcast %cst_78 : f32 to vector<16x1xf32>
    %288 = arith.divf %286, %287 : vector<16x1xf32>
    %289 = vector.broadcast %281 : vector<16x1xf32> to vector<16x32xf32>
    %290 = arith.subf %275, %289 : vector<16x32xf32>
    %cst_79 = arith.constant 9.99999996E-13 : f32
    %291 = vector.broadcast %cst_79 : f32 to vector<16x1xf32>
    %292 = arith.addf %288, %291 : vector<16x1xf32>
    %293 = math.rsqrt %292 : vector<16x1xf32>
    %294 = vector.broadcast %293 : vector<16x1xf32> to vector<16x32xf32>
    %295 = arith.mulf %290, %294 : vector<16x32xf32>
    %296 = vector.broadcast %276 : vector<1x32xf32> to vector<16x32xf32>
    %297 = arith.mulf %295, %296 : vector<16x32xf32>
    %298 = vector.broadcast %277 : vector<1x32xf32> to vector<16x32xf32>
    %299 = arith.addf %297, %298 : vector<16x32xf32>
    %c0_80 = arith.constant 0 : index
    %c0_81 = arith.constant 0 : index
    %300 = vector.load %arg7[%c0_80, %c0_81] : memref<672x384xbf16, #tpu.memory_space<vmem>>, vector<32x384xbf16>
    %301 = vector.extract_strided_slice %0 {offsets = [2, 0], sizes = [1, 384], strides = [1, 1]} : vector<6x384xf32> to vector<1x384xf32>
    %302 = arith.truncf %299 : vector<16x32xf32> to vector<16x32xbf16>
    %cst_82 = arith.constant dense<0.000000e+00> : vector<16x384xf32>
    %303 = tpu.matmul %302, %300, %cst_82 {dimension_numbers = #tpu.dot_dimension_numbers<[1], [0], [0], [1], [0, 0, 1, 1], [], []>} : vector<16x32xbf16>, vector<32x384xbf16>, vector<16x384xf32> -> vector<16x384xf32>
    %304 = vector.broadcast %301 : vector<1x384xf32> to vector<16x384xf32>
    %305 = arith.addf %303, %304 : vector<16x384xf32>
    %cst_83 = arith.constant 0.000000e+00 : f32
    %306 = vector.broadcast %cst_83 : f32 to vector<16x384xf32>
    %307 = arith.maximumf %305, %306 : vector<16x384xf32>
    %c32 = arith.constant 32 : index
    %c0_84 = arith.constant 0 : index
    %308 = vector.load %arg7[%c32, %c0_84] : memref<672x384xbf16, #tpu.memory_space<vmem>>, vector<384x128xbf16>
    %309 = vector.extract_strided_slice %0 {offsets = [3, 0], sizes = [1, 128], strides = [1, 1]} : vector<6x384xf32> to vector<1x128xf32>
    %310 = arith.truncf %307 : vector<16x384xf32> to vector<16x384xbf16>
    %cst_85 = arith.constant dense<0.000000e+00> : vector<16x128xf32>
    %311 = tpu.matmul %310, %308, %cst_85 {dimension_numbers = #tpu.dot_dimension_numbers<[1], [0], [0], [1], [0, 0, 1, 1], [], []>} : vector<16x384xbf16>, vector<384x128xbf16>, vector<16x128xf32> -> vector<16x128xf32>
    %312 = vector.broadcast %309 : vector<1x128xf32> to vector<16x128xf32>
    %313 = arith.addf %311, %312 : vector<16x128xf32>
    %cst_86 = arith.constant 0.000000e+00 : f32
    %314 = vector.broadcast %cst_86 : f32 to vector<16x128xf32>
    %315 = arith.maximumf %313, %314 : vector<16x128xf32>
    %c416 = arith.constant 416 : index
    %c0_87 = arith.constant 0 : index
    %316 = vector.load %arg7[%c416, %c0_87] : memref<672x384xbf16, #tpu.memory_space<vmem>>, vector<128x128xbf16>
    %317 = vector.extract_strided_slice %0 {offsets = [4, 0], sizes = [1, 128], strides = [1, 1]} : vector<6x384xf32> to vector<1x128xf32>
    %318 = arith.truncf %315 : vector<16x128xf32> to vector<16x128xbf16>
    %cst_88 = arith.constant dense<0.000000e+00> : vector<16x128xf32>
    %319 = tpu.matmul %318, %316, %cst_88 {dimension_numbers = #tpu.dot_dimension_numbers<[1], [0], [0], [1], [0, 0, 1, 1], [], []>} : vector<16x128xbf16>, vector<128x128xbf16>, vector<16x128xf32> -> vector<16x128xf32>
    %320 = vector.broadcast %317 : vector<1x128xf32> to vector<16x128xf32>
    %321 = arith.addf %319, %320 : vector<16x128xf32>
    %cst_89 = arith.constant 0.000000e+00 : f32
    %322 = vector.broadcast %cst_89 : f32 to vector<16x128xf32>
    %323 = arith.maximumf %321, %322 : vector<16x128xf32>
    %c544 = arith.constant 544 : index
    %c0_90 = arith.constant 0 : index
    %324 = vector.load %arg7[%c544, %c0_90] : memref<672x384xbf16, #tpu.memory_space<vmem>>, vector<128x128xbf16>
    %325 = vector.extract_strided_slice %0 {offsets = [5, 0], sizes = [1, 128], strides = [1, 1]} : vector<6x384xf32> to vector<1x128xf32>
    %326 = arith.truncf %323 : vector<16x128xf32> to vector<16x128xbf16>
    %cst_91 = arith.constant dense<0.000000e+00> : vector<16x128xf32>
    %327 = tpu.matmul %326, %324, %cst_91 {dimension_numbers = #tpu.dot_dimension_numbers<[1], [0], [0], [1], [0, 0, 1, 1], [], []>} : vector<16x128xbf16>, vector<128x128xbf16>, vector<16x128xf32> -> vector<16x128xf32>
    %328 = vector.broadcast %325 : vector<1x128xf32> to vector<16x128xf32>
    %329 = arith.addf %327, %328 : vector<16x128xf32>
    %c0_92 = arith.constant 0 : index
    %c0_93 = arith.constant 0 : index
    %330 = vector.load %arg8[%c0_92, %c0_93] : memref<16x128xf32, #tpu.memory_space<vmem>>, vector<16x128xf32>
    tpu.vector_store %arg8[%c0_92, %c0_93], %329 {strides = array<i32>} : memref<16x128xf32, #tpu.memory_space<vmem>>, vector<16x128xf32>,
    return
  }
}

</mosaic_0001>

<llo_original>
// kernel: bert_classifier_forward.1
$region0: #{bert_classifier_forward.1}
  #allocation0 [shape = 'u32[]', space=smem, size = 0x4, offset = 0x4, fixed_abs, tag = 'smem constant byte address 0x4 - core index']
  #allocation1 [shape = 'u32[144,128]{1,0:T(1,128)}', space=vmem, size = 0x12000, scoped, tag = 'internal scratch']
  %s0 = inlined_call_operand.vmem [shape: f32[16,32], index: 0, kind: input, shape index: {}]
  %s1 = inlined_call_operand.vmem [shape: f32[2,8], index: 1, kind: input, shape index: {}]
  %s2 = inlined_call_operand.vmem [shape: bf16[2,32,128], index: 2, kind: input, shape index: {}]
  %s3 = inlined_call_operand.vmem [shape: bf16[2,32,64], index: 3, kind: input, shape index: {}]
  %s4 = inlined_call_operand.vmem [shape: bf16[2,64,32], index: 4, kind: input, shape index: {}]
  %s5 = inlined_call_operand.vmem [shape: f32[2,8,128], index: 5, kind: input, shape index: {}]
  %s6 = inlined_call_operand.vmem [shape: f32[6,384], index: 6, kind: input, shape index: {}]
  %s7 = inlined_call_operand.hbm [shape: bf16[672,384], index: 7, kind: input, shape index: {}]
  %s8 = inlined_call_operand.vmem [shape: f32[16,128], index: 8, kind: output, shape index: {}]
  %s9 = sld [smem:[#allocation0]]
  $region46: #{bert_classifier_forward.1} parent=0
    _
  %s11 = ssub.s32 1, %s9
  %s12 = scalar_select 0, %s11, %s9
  $region1: #{bert_classifier_forward.1} parent=0
    #allocation2 [shape = 'u8[516096]{0}', space=vmem, size = 0x7e000, scoped, tag = 'input window, operand 7, single buffered']
    #allocation3 [shape = 's32[1]{0}', space=sflag, size = 0x4, scoped, tag = 'scoped memory for bert_classifier_forward.1']
    %13 = vsyncpa [#allocation3], 0
    // Predicated region
    $region2: #{bert_classifier_forward.1} parent=1 // pred_check
      _
    $region3: #{bert_classifier_forward.1} parent=1 // pred_check_branch
      %15 = sbr.rel (0) target = $region5
    $region4: #{bert_classifier_forward.1} parent=1 // pred_region
      _
    $region5: #{bert_classifier_forward.1} parent=1 // pred_fallthru
      _
    // Predicated region
    $region6: #{bert_classifier_forward.1} parent=1 // pred_check
      _
    $region7: #{bert_classifier_forward.1} parent=1 // pred_check_branch
      %17 = sbr.rel (0) target = $region9
    $region8: #{bert_classifier_forward.1} parent=1 // pred_region
      _
    $region9: #{bert_classifier_forward.1} parent=1 // pred_fallthru
      _
    // Predicated region
    $region10: #{bert_classifier_forward.1} parent=1 // pred_check
      _
    $region11: #{bert_classifier_forward.1} parent=1 // pred_check_branch
      %19 = sbr.rel (0) target = $region13
    $region12: #{bert_classifier_forward.1} parent=1 // pred_region
      _
    $region13: #{bert_classifier_forward.1} parent=1 // pred_fallthru
      _
    // Predicated region
    $region14: #{bert_classifier_forward.1} parent=1 // pred_check
      _
    $region15: #{bert_classifier_forward.1} parent=1 // pred_check_branch
      %21 = sbr.rel (0) target = $region17
    $region16: #{bert_classifier_forward.1} parent=1 // pred_region
      _
    $region17: #{bert_classifier_forward.1} parent=1 // pred_fallthru
      _
    // Predicated region
    $region18: #{bert_classifier_forward.1} parent=1 // pred_check
      _
    $region19: #{bert_classifier_forward.1} parent=1 // pred_check_branch
      %23 = sbr.rel (0) target = $region21
    $region20: #{bert_classifier_forward.1} parent=1 // pred_region
      _
    $region21: #{bert_classifier_forward.1} parent=1 // pred_fallthru
      _
    // Predicated region
    $region22: #{bert_classifier_forward.1} parent=1 // pred_check
      _
    $region23: #{bert_classifier_forward.1} parent=1 // pred_check_branch
      %25 = sbr.rel (0) target = $region25
    $region24: #{bert_classifier_forward.1} parent=1 // pred_region
      _
    $region25: #{bert_classifier_forward.1} parent=1 // pred_fallthru
      _
    // Predicated region
    $region26: #{bert_classifier_forward.1} parent=1 // pred_check
      _
    $region27: #{bert_classifier_forward.1} parent=1 // pred_check_branch
      %27 = sbr.rel (0) target = $region29
    $region28: #{bert_classifier_forward.1} parent=1 // pred_region
      _
    $region29: #{bert_classifier_forward.1} parent=1 // pred_fallthru
      _
    // Predicated region
    $region30: #{bert_classifier_forward.1} parent=1 // pred_check
      _
    $region31: #{bert_classifier_forward.1} parent=1 // pred_check_branch
      %29 = sbr.rel (0) target = $region33
    $region32: #{bert_classifier_forward.1} parent=1 // pred_region
      %s31 = ssub.s32 16128, 16128
      %32 = vsyncadd [#allocation3], %s31
      %s33 = sshll.u32 [#allocation2], 4
      %s34 = int_to_ptr.vmem [resolvable:$true] %s33
      %39 = dma.hbm_to_vmem [thread:$0]  %s7, 16128, %s34, [#allocation3], 192, 192, 12
    $region33: #{bert_classifier_forward.1} parent=1 // pred_fallthru
      _
    // Predicated region
    $region34: #{bert_classifier_forward.1} parent=1 // pred_check
      _
    $region35: #{bert_classifier_forward.1} parent=1 // pred_check_branch
      %41 = sbr.rel (0) target = $region37
    $region36: #{bert_classifier_forward.1} parent=1 // pred_region
      %42 = dma.done [#allocation3], 16128
    $region37: #{bert_classifier_forward.1} parent=1 // pred_fallthru
      _
    %v44 = vld [vmem:[%s6] sm:$0x3f]
    %v45 = vld [vmem:[%s6 + $0x8] sm:$0x3f]
    %v46 = vld [vmem:[%s6 + $0x10] sm:$0x3f]
    %v47 = vld [vmem:[%s0] sm:$0xff]
    %v48 = vld [vmem:[%s0 + $0x8] sm:$0xff]
    %vm49 = vcmask 261120
    %v50 = vsel %vm49, %v47, 0.0
    %51 = vadd.xlane.f32.xlu0 %v50
    %v52 = vpop.xlane.xlu0 %51
    %v53 = vsel %vm49, %v48, 0.0
    %54 = vadd.xlane.f32.xlu0 %v53
    %v55 = vpop.xlane.xlu0 %54
    %v56 = vrcp.pop 32.0
    %v57 = vmul.f32 %v52, %v56
    %v58 = vmul.f32 %v55, %v56
    %v59 = vsub.f32 %v47, %v57
    %v60 = vsub.f32 %v48, %v58
    %v61 = vmul.f32 %v59, %v59
    %v62 = vmul.f32 %v60, %v60
    %v63 = vsel %vm49, %v61, 0.0
    %64 = vadd.xlane.f32.xlu0 %v63
    %v65 = vpop.xlane.xlu0 %64
    %v66 = vsel %vm49, %v62, 0.0
    %67 = vadd.xlane.f32.xlu0 %v66
    %v68 = vpop.xlane.xlu0 %67
    %v69 = vmul.f32 %v65, %v56
    %v70 = vmul.f32 %v68, %v56
    %v71 = vadd.f32 %v69, 1e-12
    %v72 = vadd.f32 %v70, 1e-12
    %v73 = vrsqrt.pop %v71
    %v74 = vrsqrt.pop %v72
    %v75 = vmul.f32 %v59, %v73
    %v76 = vmul.f32 %v60, %v74
    %v77 = vlaneseq
    %v78 = vshrl.u32 %v77, 7
    %v79 = vsub.s32 0, %v78
    %v80 = vrot.slane %v44, %v79
    %v81 = vmul.f32 %v75, %v80
    %v82 = vmul.f32 %v76, %v80
    %v83 = vlaneseq
    %v84 = vshrl.u32 %v83, 7
    %v85 = vsub.s32 1, %v84
    %v86 = vrot.slane %v44, %v85
    %v87 = vadd.f32 %v81, %v86
    %v88 = vadd.f32 %v82, %v86
    %v89 = vld [vmem:[%s1] sm:$0x3]
    %v90 = vsub.f32 1.0, %v89
    %v91 = vmul.f32 %v90, -1e+09
    %v94 = vunpack.c.l.s4 1966171168
    %v95 = vunpack.c.0.s8 %v94
    %v96 = vlaneseq
    %v97 = vshrl.u32 %v96, 7
    %v98 = vsub.s32 %v95, %v97
    %v99 = vrot.slane %v91, %v98
    %v100 = vcombine.high %v99, %v99
    %v102 = vunpack.c.l.s4 1966171168
    %v103 = vunpack.c.0.s8 %v102
    %v104 = vlaneseq
    %v105 = vshrl.u32 %v104, 7
    %v106 = vsub.s32 %v103, %v105
    %v107 = vrot.slane %v99, %v106
    %v109 = vunpack.c.l.s4 1966171168
    %v110 = vunpack.c.0.s8 %v109
    %v111 = vlaneseq
    %v112 = vshrl.u32 %v111, 7
    %v113 = vsub.s32 %v110, %v112
    %v114 = vrot.slane %v100, %v113
    %v115 = vlaneseq
    %v116 = vshrl.u32 %v115, 7
    %v117 = vsub.s32 0, %v116
    %v118 = vrot.slane %v107, %v117
    %v119 = vlaneseq
    %v120 = vshrl.u32 %v119, 7
    %v121 = vsub.s32 0, %v120
    %v122 = vrot.slane %v114, %v121
    %v125 = vld [vmem:[%s2] sm:$0xf]
    %v126 = vld [vmem:[%s2 + $0x4] sm:$0xf]
    %v127 = vld [vmem:[%s2 + $0x8] sm:$0xf]
    %v128 = vld [vmem:[%s2 + $0xc] sm:$0xf]
    %v129 = vld [vmem:[%s3] sm:$0xf]
    %v130 = vld [vmem:[%s3 + $0x4] sm:$0xf]
    %v131 = vld [vmem:[%s3 + $0x8] sm:$0xf]
    %v132 = vld [vmem:[%s3 + $0xc] sm:$0xf]
    %v133 = vld [vmem:[%s4] sm:$0xf]
    %v134 = vld [vmem:[%s4 + $0x4] sm:$0xf]
    %v135 = vld [vmem:[%s4 + $0x8] sm:$0xf]
    %v136 = vld [vmem:[%s4 + $0xc] sm:$0xf]
    %v137 = vld [vmem:[%s4 + $0x10] sm:$0xf]
    %v138 = vld [vmem:[%s4 + $0x14] sm:$0xf]
    %v139 = vld [vmem:[%s4 + $0x18] sm:$0xf]
    %v140 = vld [vmem:[%s4 + $0x1c] sm:$0xf]
    %v141 = vld [vmem:[%s5] sm:$0xff]
    %v142 = vpack.c.bf16 %v88, %v87
    %v143 = vlaneseq
    %v144 = vshrl.u32 %v143, 7
    %v145 = vsub.s32 0, %v144
    %v146 = vrot.slane %v141, %v145
    %v151 = vunpack.c.l.b16 %v125
    %v152 = vunpack.c.l.b16 %v126
    %v153 = vunpack.c.l.b16 %v127
    %v154 = vunpack.c.l.b16 %v128
    %v155 = vpack.c.b16 %v152, %v151
    %v156 = vpack.c.b16 %v154, %v153
    %v160 = vsel %vm49, %v142, 0
    %162 = vmatprep.subr.bf16.mxu0 0
    %163 = vmatpush1.bf16.msra.mxu0 %v155
    %164 = vmatprep.subr.bf16.mxu0 0
    %165 = vmatpush1.bf16.msra.mxu0 %v156
    %166 = vmatprep.subr.bf16.mxu0 0
    %167 = vmatpush1.bf16.msra.mxu0 0
    %168 = vmatprep.subr.bf16.mxu0 0
    %169 = vmatpush1.bf16.msra.mxu0 0
    %170 = vmatprep.subr.bf16.mxu0 0
    %171 = vmatpush1.bf16.msra.mxu0 0
    %172 = vmatprep.subr.bf16.mxu0 0
    %173 = vmatpush1.bf16.msra.mxu0 0
    %174 = vmatprep.subr.bf16.mxu0 0
    %175 = vmatpush1.bf16.msra.mxu0 0
    %176 = vmatprep.subr.bf16.mxu0 0
    %177 = vmatpush1.bf16.msra.mxu0 0
    %178 = vmatprep.subr.bf16.mxu0 0
    %179 = vmatpush1.bf16.msra.mxu0 0
    %180 = vmatprep.subr.bf16.mxu0 0
    %181 = vmatpush1.bf16.msra.mxu0 0
    %182 = vmatprep.subr.bf16.mxu0 0
    %183 = vmatpush1.bf16.msra.mxu0 0
    %184 = vmatprep.subr.bf16.mxu0 0
    %185 = vmatpush1.bf16.msra.mxu0 0
    %186 = vmatprep.subr.bf16.mxu0 0
    %187 = vmatpush1.bf16.msra.mxu0 0
    %188 = vmatprep.subr.bf16.mxu0 0
    %189 = vmatpush1.bf16.msra.mxu0 0
    %190 = vmatprep.subr.bf16.mxu0 0
    %191 = vmatpush1.bf16.msra.mxu0 0
    %192 = vmatprep.subr.bf16.mxu0 0
    %193 = vmatpush1.bf16.msra.mxu0 0
    %194 = vmatprep.mubr.bf16.mxu0 0
    %195 = vmatmul.mubr.bf16.gmra.mrb[0].mxu0 %v160
    %v196 = vpop.f32.mrb[0].mxu0
    %v197 = vadd.f32 %v146, %v196
    %v198 = vpop.f32.mrb[0].mxu0
    %v199 = vpop.f32.mrb[0].mxu0
    %v200 = vadd.f32 %v146, %v199
    %v201 = vpop.f32.mrb[0].mxu0
    %202 = vdwg.mxu0
    %205 = vrot.lane.b32.xlu0 %v197, 112
    %v206 = vpop.permute.xlu0 %205
    %207 = vrot.lane.b32.xlu0 %v200, 112
    %v208 = vpop.permute.xlu0 %207
    %v211 = vpack.c.bf16 %v197, %v197
    %v212 = vpack.c.bf16 %v200, %v200
    %v213 = vpack.c.bf16 %v206, %v206
    %v214 = vpack.c.bf16 %v208, %v208
    %216 = vrot.lane.b32.xlu0 %v211, 96
    %v217 = vpop.permute.xlu0 %216
    %vm218 = vcmask 130048
    %v220 = vsel %vm218, %v211, 0
    %v223 = vsel %vm218, %v217, 0
    %225 = vmatprep.subr.bf16.mxu0 0
    %226 = vmatpush1.bf16.xpose.msra.mxu0 %v223
    %227 = vmatprep.subr.bf16.mxu0 0
    %228 = vmatpush1.bf16.xpose.msra.mxu0 0
    %229 = vmatprep.subr.bf16.mxu0 0
    %230 = vmatpush1.bf16.xpose.msra.mxu0 0
    %231 = vmatprep.subr.bf16.mxu0 0
    %232 = vmatpush1.bf16.xpose.msra.mxu0 0
    %233 = vmatprep.subr.bf16.mxu0 0
    %234 = vmatpush1.bf16.xpose.msra.mxu0 0
    %235 = vmatprep.subr.bf16.mxu0 0
    %236 = vmatpush1.bf16.xpose.msra.mxu0 0
    %237 = vmatprep.subr.bf16.mxu0 0
    %238 = vmatpush1.bf16.xpose.msra.mxu0 0
    %239 = vmatprep.subr.bf16.mxu0 0
    %240 = vmatpush1.bf16.xpose.msra.mxu0 0
    %241 = vmatprep.subr.bf16.mxu0 0
    %242 = vmatpush1.bf16.xpose.msra.mxu0 0
    %243 = vmatprep.subr.bf16.mxu0 0
    %244 = vmatpush1.bf16.xpose.msra.mxu0 0
    %245 = vmatprep.subr.bf16.mxu0 0
    %246 = vmatpush1.bf16.xpose.msra.mxu0 0
    %247 = vmatprep.subr.bf16.mxu0 0
    %248 = vmatpush1.bf16.xpose.msra.mxu0 0
    %249 = vmatprep.subr.bf16.mxu0 0
    %250 = vmatpush1.bf16.xpose.msra.mxu0 0
    %251 = vmatprep.subr.bf16.mxu0 0
    %252 = vmatpush1.bf16.xpose.msra.mxu0 0
    %253 = vmatprep.subr.bf16.mxu0 0
    %254 = vmatpush1.bf16.xpose.msra.mxu0 0
    %255 = vmatprep.subr.bf16.mxu0 0
    %256 = vmatpush1.bf16.xpose.msra.mxu0 0
    %257 = vmatprep.mubr.bf16.mxu0 0
    %258 = vmatmul.mubr.bf16.gmra.mrb[0].mxu0 %v220
    %v259 = vpop.f32.mrb[0].mxu0
    %v260 = vadd.f32 0.0, %v259
    %v261 = vpop.f32.mrb[0].mxu0
    %v262 = vpop.f32.mrb[0].mxu0
    %v263 = vpop.f32.mrb[0].mxu0
    %264 = vdwg.mxu0
    %266 = vrot.lane.b32.xlu0 %v212, 96
    %v267 = vpop.permute.xlu0 %266
    %v269 = vsel %vm218, %v212, 0
    %v272 = vsel %vm218, %v267, 0
    %274 = vmatprep.subr.bf16.mxu0 0
    %275 = vmatpush1.bf16.xpose.msra.mxu0 %v272
    %276 = vmatprep.subr.bf16.mxu0 0
    %277 = vmatpush1.bf16.xpose.msra.mxu0 0
    %278 = vmatprep.subr.bf16.mxu0 0
    %279 = vmatpush1.bf16.xpose.msra.mxu0 0
    %280 = vmatprep.subr.bf16.mxu0 0
    %281 = vmatpush1.bf16.xpose.msra.mxu0 0
    %282 = vmatprep.subr.bf16.mxu0 0
    %283 = vmatpush1.bf16.xpose.msra.mxu0 0
    %284 = vmatprep.subr.bf16.mxu0 0
    %285 = vmatpush1.bf16.xpose.msra.mxu0 0
    %286 = vmatprep.subr.bf16.mxu0 0
    %287 = vmatpush1.bf16.xpose.msra.mxu0 0
    %288 = vmatprep.subr.bf16.mxu0 0
    %289 = vmatpush1.bf16.xpose.msra.mxu0 0
    %290 = vmatprep.subr.bf16.mxu0 0
    %291 = vmatpush1.bf16.xpose.msra.mxu0 0
    %292 = vmatprep.subr.bf16.mxu0 0
    %293 = vmatpush1.bf16.xpose.msra.mxu0 0
    %294 = vmatprep.subr.bf16.mxu0 0
    %295 = vmatpush1.bf16.xpose.msra.mxu0 0
    %296 = vmatprep.subr.bf16.mxu0 0
    %297 = vmatpush1.bf16.xpose.msra.mxu0 0
    %298 = vmatprep.subr.bf16.mxu0 0
    %299 = vmatpush1.bf16.xpose.msra.mxu0 0
    %300 = vmatprep.subr.bf16.mxu0 0
    %301 = vmatpush1.bf16.xpose.msra.mxu0 0
    %302 = vmatprep.subr.bf16.mxu0 0
    %303 = vmatpush1.bf16.xpose.msra.mxu0 0
    %304 = vmatprep.subr.bf16.mxu0 0
    %305 = vmatpush1.bf16.xpose.msra.mxu0 0
    %306 = vmatprep.mubr.bf16.mxu0 0
    %307 = vmatmul.mubr.bf16.gmra.mrb[0].mxu0 %v269
    %v308 = vpop.f32.mrb[0].mxu0
    %v309 = vadd.f32 0.0, %v308
    %v310 = vpop.f32.mrb[0].mxu0
    %v311 = vpop.f32.mrb[0].mxu0
    %v312 = vpop.f32.mrb[0].mxu0
    %313 = vdwg.mxu0
    %315 = vrot.lane.b32.xlu0 %v213, 96
    %v316 = vpop.permute.xlu0 %315
    %v318 = vsel %vm218, %v213, 0
    %v321 = vsel %vm218, %v316, 0
    %323 = vmatprep.subr.bf16.mxu0 0
    %324 = vmatpush1.bf16.xpose.msra.mxu0 %v321
    %325 = vmatprep.subr.bf16.mxu0 0
    %326 = vmatpush1.bf16.xpose.msra.mxu0 0
    %327 = vmatprep.subr.bf16.mxu0 0
    %328 = vmatpush1.bf16.xpose.msra.mxu0 0
    %329 = vmatprep.subr.bf16.mxu0 0
    %330 = vmatpush1.bf16.xpose.msra.mxu0 0
    %331 = vmatprep.subr.bf16.mxu0 0
    %332 = vmatpush1.bf16.xpose.msra.mxu0 0
    %333 = vmatprep.subr.bf16.mxu0 0
    %334 = vmatpush1.bf16.xpose.msra.mxu0 0
    %335 = vmatprep.subr.bf16.mxu0 0
    %336 = vmatpush1.bf16.xpose.msra.mxu0 0
    %337 = vmatprep.subr.bf16.mxu0 0
    %338 = vmatpush1.bf16.xpose.msra.mxu0 0
    %339 = vmatprep.subr.bf16.mxu0 0
    %340 = vmatpush1.bf16.xpose.msra.mxu0 0
    %341 = vmatprep.subr.bf16.mxu0 0
    %342 = vmatpush1.bf16.xpose.msra.mxu0 0
    %343 = vmatprep.subr.bf16.mxu0 0
    %344 = vmatpush1.bf16.xpose.msra.mxu0 0
    %345 = vmatprep.subr.bf16.mxu0 0
    %346 = vmatpush1.bf16.xpose.msra.mxu0 0
    %347 = vmatprep.subr.bf16.mxu0 0
    %348 = vmatpush1.bf16.xpose.msra.mxu0 0
    %349 = vmatprep.subr.bf16.mxu0 0
    %350 = vmatpush1.bf16.xpose.msra.mxu0 0
    %351 = vmatprep.subr.bf16.mxu0 0
    %352 = vmatpush1.bf16.xpose.msra.mxu0 0
    %353 = vmatprep.subr.bf16.mxu0 0
    %354 = vmatpush1.bf16.xpose.msra.mxu0 0
    %355 = vmatprep.mubr.bf16.mxu0 0
    %356 = vmatmul.mubr.bf16.gmra.mrb[0].mxu0 %v318
    %v357 = vpop.f32.mrb[0].mxu0
    %v358 = vadd.f32 0.0, %v357
    %v359 = vpop.f32.mrb[0].mxu0
    %v360 = vpop.f32.mrb[0].mxu0
    %v361 = vpop.f32.mrb[0].mxu0
    %362 = vdwg.mxu0
    %364 = vrot.lane.b32.xlu0 %v214, 96
    %v365 = vpop.permute.xlu0 %364
    %v367 = vsel %vm218, %v214, 0
    %v370 = vsel %vm218, %v365, 0
    %372 = vmatprep.subr.bf16.mxu0 0
    %373 = vmatpush1.bf16.xpose.msra.mxu0 %v370
    %374 = vmatprep.subr.bf16.mxu0 0
    %375 = vmatpush1.bf16.xpose.msra.mxu0 0
    %376 = vmatprep.subr.bf16.mxu0 0
    %377 = vmatpush1.bf16.xpose.msra.mxu0 0
    %378 = vmatprep.subr.bf16.mxu0 0
    %379 = vmatpush1.bf16.xpose.msra.mxu0 0
    %380 = vmatprep.subr.bf16.mxu0 0
    %381 = vmatpush1.bf16.xpose.msra.mxu0 0
    %382 = vmatprep.subr.bf16.mxu0 0
    %383 = vmatpush1.bf16.xpose.msra.mxu0 0
    %384 = vmatprep.subr.bf16.mxu0 0
    %385 = vmatpush1.bf16.xpose.msra.mxu0 0
    %386 = vmatprep.subr.bf16.mxu0 0
    %387 = vmatpush1.bf16.xpose.msra.mxu0 0
    %388 = vmatprep.subr.bf16.mxu0 0
    %389 = vmatpush1.bf16.xpose.msra.mxu0 0
    %390 = vmatprep.subr.bf16.mxu0 0
    %391 = vmatpush1.bf16.xpose.msra.mxu0 0
    %392 = vmatprep.subr.bf16.mxu0 0
    %393 = vmatpush1.bf16.xpose.msra.mxu0 0
    %394 = vmatprep.subr.bf16.mxu0 0
    %395 = vmatpush1.bf16.xpose.msra.mxu0 0
    %396 = vmatprep.subr.bf16.mxu0 0
    %397 = vmatpush1.bf16.xpose.msra.mxu0 0
    %398 = vmatprep.subr.bf16.mxu0 0
    %399 = vmatpush1.bf16.xpose.msra.mxu0 0
    %400 = vmatprep.subr.bf16.mxu0 0
    %401 = vmatpush1.bf16.xpose.msra.mxu0 0
    %402 = vmatprep.subr.bf16.mxu0 0
    %403 = vmatpush1.bf16.xpose.msra.mxu0 0
    %404 = vmatprep.mubr.bf16.mxu0 0
    %405 = vmatmul.mubr.bf16.gmra.mrb[0].mxu0 %v367
    %v406 = vpop.f32.mrb[0].mxu0
    %v407 = vadd.f32 0.0, %v406
    %v408 = vpop.f32.mrb[0].mxu0
    %v409 = vpop.f32.mrb[0].mxu0
    %v410 = vpop.f32.mrb[0].mxu0
    %411 = vdwg.mxu0
    %v412 = vmul.f32 %v260, 0.25
    %v413 = vmul.f32 %v309, 0.25
    %v414 = vmul.f32 %v358, 0.25
    %v415 = vmul.f32 %v407, 0.25
    %v416 = vadd.f32 %v412, %v118
    %v417 = vadd.f32 %v413, %v122
    %v418 = vadd.f32 %v414, %v118
    %v419 = vadd.f32 %v415, %v122
    %vm420 = vcmask 64512
    %v421 = vsel %vm420, %v416, -inf
    %422 = vmax.xlane.f32.xlu0 %v421
    %v423 = vpop.xlane.xlu0 %422
    %v424 = vsel %vm420, %v417, -inf
    %425 = vmax.xlane.f32.xlu0 %v424
    %v426 = vpop.xlane.xlu0 %425
    %v427 = vsel %vm420, %v418, -inf
    %428 = vmax.xlane.f32.xlu0 %v427
    %v429 = vpop.xlane.xlu0 %428
    %v430 = vsel %vm420, %v419, -inf
    %431 = vmax.xlane.f32.xlu0 %v430
    %v432 = vpop.xlane.xlu0 %431
    %v433 = vsub.f32 %v416, %v423
    %v434 = vsub.f32 %v417, %v426
    %v435 = vsub.f32 %v418, %v429
    %v436 = vsub.f32 %v419, %v432
    %v437 = vmul.f32 %v433, 1.442695
    %v438 = vpow.pop %v437
    %v439 = vmul.f32 %v434, 1.442695
    %v440 = vpow.pop %v439
    %v441 = vmul.f32 %v435, 1.442695
    %v442 = vpow.pop %v441
    %v443 = vmul.f32 %v436, 1.442695
    %v444 = vpow.pop %v443
    %v445 = vsel %vm420, %v438, 0.0
    %446 = vadd.xlane.f32.xlu0 %v445
    %v447 = vpop.xlane.xlu0 %446
    %v448 = vsel %vm420, %v440, 0.0
    %449 = vadd.xlane.f32.xlu0 %v448
    %v450 = vpop.xlane.xlu0 %449
    %v451 = vsel %vm420, %v442, 0.0
    %452 = vadd.xlane.f32.xlu0 %v451
    %v453 = vpop.xlane.xlu0 %452
    %v454 = vsel %vm420, %v444, 0.0
    %455 = vadd.xlane.f32.xlu0 %v454
    %v456 = vpop.xlane.xlu0 %455
    %v457 = vrcp.pop %v447
    %v458 = vmul.f32 %v438, %v457
    %v459 = vrcp.pop %v450
    %v460 = vmul.f32 %v440, %v459
    %v461 = vrcp.pop %v453
    %v462 = vmul.f32 %v442, %v461
    %v463 = vrcp.pop %v456
    %v464 = vmul.f32 %v444, %v463
    %v465 = vpack.c.bf16 %v458, %v458
    %v466 = vpack.c.bf16 %v460, %v460
    %v467 = vpack.c.bf16 %v462, %v462
    %v468 = vpack.c.bf16 %v464, %v464
    %469 = vrot.lane.b32.xlu0 %v211, 64
    %v470 = vpop.permute.xlu0 %469
    %v472 = vsel %vm420, %v465, 0
    %vm474 = vcmask 1043456
    %v476 = vsel %vm474, %v470, 0
    %478 = vmatprep.subr.bf16.mxu0 0
    %479 = vmatpush1.bf16.msra.mxu0 %v476
    %480 = vmatprep.subr.bf16.mxu0 0
    %481 = vmatpush1.bf16.msra.mxu0 0
    %482 = vmatprep.subr.bf16.mxu0 0
    %483 = vmatpush1.bf16.msra.mxu0 0
    %484 = vmatprep.subr.bf16.mxu0 0
    %485 = vmatpush1.bf16.msra.mxu0 0
    %486 = vmatprep.subr.bf16.mxu0 0
    %487 = vmatpush1.bf16.msra.mxu0 0
    %488 = vmatprep.subr.bf16.mxu0 0
    %489 = vmatpush1.bf16.msra.mxu0 0
    %490 = vmatprep.subr.bf16.mxu0 0
    %491 = vmatpush1.bf16.msra.mxu0 0
    %492 = vmatprep.subr.bf16.mxu0 0
    %493 = vmatpush1.bf16.msra.mxu0 0
    %494 = vmatprep.subr.bf16.mxu0 0
    %495 = vmatpush1.bf16.msra.mxu0 0
    %496 = vmatprep.subr.bf16.mxu0 0
    %497 = vmatpush1.bf16.msra.mxu0 0
    %498 = vmatprep.subr.bf16.mxu0 0
    %499 = vmatpush1.bf16.msra.mxu0 0
    %500 = vmatprep.subr.bf16.mxu0 0
    %501 = vmatpush1.bf16.msra.mxu0 0
    %502 = vmatprep.subr.bf16.mxu0 0
    %503 = vmatpush1.bf16.msra.mxu0 0
    %504 = vmatprep.subr.bf16.mxu0 0
    %505 = vmatpush1.bf16.msra.mxu0 0
    %506 = vmatprep.subr.bf16.mxu0 0
    %507 = vmatpush1.bf16.msra.mxu0 0
    %508 = vmatprep.subr.bf16.mxu0 0
    %509 = vmatpush1.bf16.msra.mxu0 0
    %510 = vmatprep.mubr.bf16.mxu0 0
    %511 = vmatmul.mubr.bf16.gmra.mrb[0].mxu0 %v472
    %v512 = vpop.f32.mrb[0].mxu0
    %v513 = vadd.f32 0.0, %v512
    %v514 = vpop.f32.mrb[0].mxu0
    %v515 = vpop.f32.mrb[0].mxu0
    %v516 = vpop.f32.mrb[0].mxu0
    %517 = vdwg.mxu0
    %518 = vrot.lane.b32.xlu0 %v212, 64
    %v519 = vpop.permute.xlu0 %518
    %v521 = vsel %vm420, %v466, 0
    %v524 = vsel %vm474, %v519, 0
    %526 = vmatprep.subr.bf16.mxu0 0
    %527 = vmatpush1.bf16.msra.mxu0 %v524
    %528 = vmatprep.subr.bf16.mxu0 0
    %529 = vmatpush1.bf16.msra.mxu0 0
    %530 = vmatprep.subr.bf16.mxu0 0
    %531 = vmatpush1.bf16.msra.mxu0 0
    %532 = vmatprep.subr.bf16.mxu0 0
    %533 = vmatpush1.bf16.msra.mxu0 0
    %534 = vmatprep.subr.bf16.mxu0 0
    %535 = vmatpush1.bf16.msra.mxu0 0
    %536 = vmatprep.subr.bf16.mxu0 0
    %537 = vmatpush1.bf16.msra.mxu0 0
    %538 = vmatprep.subr.bf16.mxu0 0
    %539 = vmatpush1.bf16.msra.mxu0 0
    %540 = vmatprep.subr.bf16.mxu0 0
    %541 = vmatpush1.bf16.msra.mxu0 0
    %542 = vmatprep.subr.bf16.mxu0 0
    %543 = vmatpush1.bf16.msra.mxu0 0
    %544 = vmatprep.subr.bf16.mxu0 0
    %545 = vmatpush1.bf16.msra.mxu0 0
    %546 = vmatprep.subr.bf16.mxu0 0
    %547 = vmatpush1.bf16.msra.mxu0 0
    %548 = vmatprep.subr.bf16.mxu0 0
    %549 = vmatpush1.bf16.msra.mxu0 0
    %550 = vmatprep.subr.bf16.mxu0 0
    %551 = vmatpush1.bf16.msra.mxu0 0
    %552 = vmatprep.subr.bf16.mxu0 0
    %553 = vmatpush1.bf16.msra.mxu0 0
    %554 = vmatprep.subr.bf16.mxu0 0
    %555 = vmatpush1.bf16.msra.mxu0 0
    %556 = vmatprep.subr.bf16.mxu0 0
    %557 = vmatpush1.bf16.msra.mxu0 0
    %558 = vmatprep.mubr.bf16.mxu0 0
    %559 = vmatmul.mubr.bf16.gmra.mrb[0].mxu0 %v521
    %v560 = vpop.f32.mrb[0].mxu0
    %v561 = vadd.f32 0.0, %v560
    %v562 = vpop.f32.mrb[0].mxu0
    %v563 = vpop.f32.mrb[0].mxu0
    %v564 = vpop.f32.mrb[0].mxu0
    %565 = vdwg.mxu0
    %566 = vrot.lane.b32.xlu0 %v213, 64
    %v567 = vpop.permute.xlu0 %566
    %v569 = vsel %vm420, %v467, 0
    %v572 = vsel %vm474, %v567, 0
    %574 = vmatprep.subr.bf16.mxu0 0
    %575 = vmatpush1.bf16.msra.mxu0 %v572
    %576 = vmatprep.subr.bf16.mxu0 0
    %577 = vmatpush1.bf16.msra.mxu0 0
    %578 = vmatprep.subr.bf16.mxu0 0
    %579 = vmatpush1.bf16.msra.mxu0 0
    %580 = vmatprep.subr.bf16.mxu0 0
    %581 = vmatpush1.bf16.msra.mxu0 0
    %582 = vmatprep.subr.bf16.mxu0 0
    %583 = vmatpush1.bf16.msra.mxu0 0
    %584 = vmatprep.subr.bf16.mxu0 0
    %585 = vmatpush1.bf16.msra.mxu0 0
    %586 = vmatprep.subr.bf16.mxu0 0
    %587 = vmatpush1.bf16.msra.mxu0 0
    %588 = vmatprep.subr.bf16.mxu0 0
    %589 = vmatpush1.bf16.msra.mxu0 0
    %590 = vmatprep.subr.bf16.mxu0 0
    %591 = vmatpush1.bf16.msra.mxu0 0
    %592 = vmatprep.subr.bf16.mxu0 0
    %593 = vmatpush1.bf16.msra.mxu0 0
    %594 = vmatprep.subr.bf16.mxu0 0
    %595 = vmatpush1.bf16.msra.mxu0 0
    %596 = vmatprep.subr.bf16.mxu0 0
    %597 = vmatpush1.bf16.msra.mxu0 0
    %598 = vmatprep.subr.bf16.mxu0 0
    %599 = vmatpush1.bf16.msra.mxu0 0
    %600 = vmatprep.subr.bf16.mxu0 0
    %601 = vmatpush1.bf16.msra.mxu0 0
    %602 = vmatprep.subr.bf16.mxu0 0
    %603 = vmatpush1.bf16.msra.mxu0 0
    %604 = vmatprep.subr.bf16.mxu0 0
    %605 = vmatpush1.bf16.msra.mxu0 0
    %606 = vmatprep.mubr.bf16.mxu0 0
    %607 = vmatmul.mubr.bf16.gmra.mrb[0].mxu0 %v569
    %v608 = vpop.f32.mrb[0].mxu0
    %v609 = vadd.f32 0.0, %v608
    %v610 = vpop.f32.mrb[0].mxu0
    %v611 = vpop.f32.mrb[0].mxu0
    %v612 = vpop.f32.mrb[0].mxu0
    %613 = vdwg.mxu0
    %614 = vrot.lane.b32.xlu0 %v214, 64
    %v615 = vpop.permute.xlu0 %614
    %v617 = vsel %vm420, %v468, 0
    %v620 = vsel %vm474, %v615, 0
    %622 = vmatprep.subr.bf16.mxu0 0
    %623 = vmatpush1.bf16.msra.mxu0 %v620
    %624 = vmatprep.subr.bf16.mxu0 0
    %625 = vmatpush1.bf16.msra.mxu0 0
    %626 = vmatprep.subr.bf16.mxu0 0
    %627 = vmatpush1.bf16.msra.mxu0 0
    %628 = vmatprep.subr.bf16.mxu0 0
    %629 = vmatpush1.bf16.msra.mxu0 0
    %630 = vmatprep.subr.bf16.mxu0 0
    %631 = vmatpush1.bf16.msra.mxu0 0
    %632 = vmatprep.subr.bf16.mxu0 0
    %633 = vmatpush1.bf16.msra.mxu0 0
    %634 = vmatprep.subr.bf16.mxu0 0
    %635 = vmatpush1.bf16.msra.mxu0 0
    %636 = vmatprep.subr.bf16.mxu0 0
    %637 = vmatpush1.bf16.msra.mxu0 0
    %638 = vmatprep.subr.bf16.mxu0 0
    %639 = vmatpush1.bf16.msra.mxu0 0
    %640 = vmatprep.subr.bf16.mxu0 0
    %641 = vmatpush1.bf16.msra.mxu0 0
    %642 = vmatprep.subr.bf16.mxu0 0
    %643 = vmatpush1.bf16.msra.mxu0 0
    %644 = vmatprep.subr.bf16.mxu0 0
    %645 = vmatpush1.bf16.msra.mxu0 0
    %646 = vmatprep.subr.bf16.mxu0 0
    %647 = vmatpush1.bf16.msra.mxu0 0
    %648 = vmatprep.subr.bf16.mxu0 0
    %649 = vmatpush1.bf16.msra.mxu0 0
    %650 = vmatprep.subr.bf16.mxu0 0
    %651 = vmatpush1.bf16.msra.mxu0 0
    %652 = vmatprep.subr.bf16.mxu0 0
    %653 = vmatpush1.bf16.msra.mxu0 0
    %654 = vmatprep.mubr.bf16.mxu0 0
    %655 = vmatmul.mubr.bf16.gmra.mrb[0].mxu0 %v617
    %v656 = vpop.f32.mrb[0].mxu0
    %v657 = vadd.f32 0.0, %v656
    %v658 = vpop.f32.mrb[0].mxu0
    %v659 = vpop.f32.mrb[0].mxu0
    %v660 = vpop.f32.mrb[0].mxu0
    %661 = vdwg.mxu0
    %664 = vrot.lane.b32.xlu0 %v609, 16
    %v665 = vpop.permute.xlu0 %664
    %666 = vrot.lane.b32.xlu0 %v657, 16
    %v667 = vpop.permute.xlu0 %666
    %v670 = vsel %vm218, %v513, %v665
    %v671 = vsel %vm218, %v561, %v667
    %v672 = vpack.c.bf16 %v671, %v670
    %v673 = vlaneseq
    %v674 = vshrl.u32 %v673, 7
    %v675 = vsub.s32 2, %v674
    %v676 = vrot.slane %v141, %v675
    %677 = vrot.lane.b32.xlu0 %v155, 32
    %v678 = vpop.permute.xlu0 %677
    %679 = vrot.lane.b32.xlu0 %v156, 32
    %v680 = vpop.permute.xlu0 %679
    %v684 = vsel %vm49, %v672, 0
    %686 = vmatprep.subr.bf16.mxu0 0
    %687 = vmatpush1.bf16.msra.mxu0 %v678
    %688 = vmatprep.subr.bf16.mxu0 0
    %689 = vmatpush1.bf16.msra.mxu0 %v680
    %690 = vmatprep.subr.bf16.mxu0 0
    %691 = vmatpush1.bf16.msra.mxu0 0
    %692 = vmatprep.subr.bf16.mxu0 0
    %693 = vmatpush1.bf16.msra.mxu0 0
    %694 = vmatprep.subr.bf16.mxu0 0
    %695 = vmatpush1.bf16.msra.mxu0 0
    %696 = vmatprep.subr.bf16.mxu0 0
    %697 = vmatpush1.bf16.msra.mxu0 0
    %698 = vmatprep.subr.bf16.mxu0 0
    %699 = vmatpush1.bf16.msra.mxu0 0
    %700 = vmatprep.subr.bf16.mxu0 0
    %701 = vmatpush1.bf16.msra.mxu0 0
    %702 = vmatprep.subr.bf16.mxu0 0
    %703 = vmatpush1.bf16.msra.mxu0 0
    %704 = vmatprep.subr.bf16.mxu0 0
    %705 = vmatpush1.bf16.msra.mxu0 0
    %706 = vmatprep.subr.bf16.mxu0 0
    %707 = vmatpush1.bf16.msra.mxu0 0
    %708 = vmatprep.subr.bf16.mxu0 0
    %709 = vmatpush1.bf16.msra.mxu0 0
    %710 = vmatprep.subr.bf16.mxu0 0
    %711 = vmatpush1.bf16.msra.mxu0 0
    %712 = vmatprep.subr.bf16.mxu0 0
    %713 = vmatpush1.bf16.msra.mxu0 0
    %714 = vmatprep.subr.bf16.mxu0 0
    %715 = vmatpush1.bf16.msra.mxu0 0
    %716 = vmatprep.subr.bf16.mxu0 0
    %717 = vmatpush1.bf16.msra.mxu0 0
    %718 = vmatprep.mubr.bf16.mxu0 0
    %719 = vmatmul.mubr.bf16.gmra.mrb[0].mxu0 %v684
    %v720 = vpop.f32.mrb[0].mxu0
    %v721 = vadd.f32 %v676, %v720
    %v722 = vpop.f32.mrb[0].mxu0
    %v723 = vpop.f32.mrb[0].mxu0
    %v724 = vadd.f32 %v676, %v723
    %v725 = vpop.f32.mrb[0].mxu0
    %726 = vdwg.mxu0
    %v727 = vadd.f32 %v87, %v721
    %v728 = vadd.f32 %v88, %v724
    %v729 = vsel %vm49, %v727, 0.0
    %730 = vadd.xlane.f32.xlu0 %v729
    %v731 = vpop.xlane.xlu0 %730
    %v732 = vsel %vm49, %v728, 0.0
    %733 = vadd.xlane.f32.xlu0 %v732
    %v734 = vpop.xlane.xlu0 %733
    %v735 = vmul.f32 %v731, %v56
    %v736 = vmul.f32 %v734, %v56
    %v737 = vsub.f32 %v727, %v735
    %v738 = vsub.f32 %v728, %v736
    %v739 = vmul.f32 %v737, %v737
    %v740 = vmul.f32 %v738, %v738
    %v741 = vsel %vm49, %v739, 0.0
    %742 = vadd.xlane.f32.xlu0 %v741
    %v743 = vpop.xlane.xlu0 %742
    %v744 = vsel %vm49, %v740, 0.0
    %745 = vadd.xlane.f32.xlu0 %v744
    %v746 = vpop.xlane.xlu0 %745
    %v747 = vmul.f32 %v743, %v56
    %v748 = vmul.f32 %v746, %v56
    %v749 = vadd.f32 %v747, 1e-12
    %v750 = vadd.f32 %v748, 1e-12
    %v751 = vrsqrt.pop %v749
    %v752 = vrsqrt.pop %v750
    %v753 = vmul.f32 %v737, %v751
    %v754 = vmul.f32 %v738, %v752
    %v755 = vlaneseq
    %v756 = vshrl.u32 %v755, 7
    %v757 = vsub.s32 3, %v756
    %v758 = vrot.slane %v141, %v757
    %v759 = vmul.f32 %v753, %v758
    %v760 = vmul.f32 %v754, %v758
    %v761 = vlaneseq
    %v762 = vshrl.u32 %v761, 7
    %v763 = vsub.s32 4, %v762
    %v764 = vrot.slane %v141, %v763
    %v765 = vadd.f32 %v759, %v764
    %v766 = vadd.f32 %v760, %v764
    %v767 = vpack.c.bf16 %v766, %v765
    %v768 = vlaneseq
    %v769 = vshrl.u32 %v768, 7
    %v770 = vsub.s32 1, %v769
    %v771 = vrot.slane %v141, %v770
    %v776 = vunpack.c.l.b16 %v129
    %v777 = vunpack.c.l.b16 %v130
    %v778 = vunpack.c.l.b16 %v131
    %v779 = vunpack.c.l.b16 %v132
    %v780 = vpack.c.b16 %v777, %v776
    %v781 = vpack.c.b16 %v779, %v778
    %v785 = vsel %vm49, %v767, 0
    %787 = vmatprep.subr.bf16.mxu0 0
    %788 = vmatpush1.bf16.msra.mxu0 %v780
    %789 = vmatprep.subr.bf16.mxu0 0
    %790 = vmatpush1.bf16.msra.mxu0 %v781
    %791 = vmatprep.subr.bf16.mxu0 0
    %792 = vmatpush1.bf16.msra.mxu0 0
    %793 = vmatprep.subr.bf16.mxu0 0
    %794 = vmatpush1.bf16.msra.mxu0 0
    %795 = vmatprep.subr.bf16.mxu0 0
    %796 = vmatpush1.bf16.msra.mxu0 0
    %797 = vmatprep.subr.bf16.mxu0 0
    %798 = vmatpush1.bf16.msra.mxu0 0
    %799 = vmatprep.subr.bf16.mxu0 0
    %800 = vmatpush1.bf16.msra.mxu0 0
    %801 = vmatprep.subr.bf16.mxu0 0
    %802 = vmatpush1.bf16.msra.mxu0 0
    %803 = vmatprep.subr.bf16.mxu0 0
    %804 = vmatpush1.bf16.msra.mxu0 0
    %805 = vmatprep.subr.bf16.mxu0 0
    %806 = vmatpush1.bf16.msra.mxu0 0
    %807 = vmatprep.subr.bf16.mxu0 0
    %808 = vmatpush1.bf16.msra.mxu0 0
    %809 = vmatprep.subr.bf16.mxu0 0
    %810 = vmatpush1.bf16.msra.mxu0 0
    %811 = vmatprep.subr.bf16.mxu0 0
    %812 = vmatpush1.bf16.msra.mxu0 0
    %813 = vmatprep.subr.bf16.mxu0 0
    %814 = vmatpush1.bf16.msra.mxu0 0
    %815 = vmatprep.subr.bf16.mxu0 0
    %816 = vmatpush1.bf16.msra.mxu0 0
    %817 = vmatprep.subr.bf16.mxu0 0
    %818 = vmatpush1.bf16.msra.mxu0 0
    %819 = vmatprep.mubr.bf16.mxu0 0
    %820 = vmatmul.mubr.bf16.gmra.mrb[0].mxu0 %v785
    %v821 = vpop.f32.mrb[0].mxu0
    %v822 = vadd.f32 %v771, %v821
    %v823 = vpop.f32.mrb[0].mxu0
    %v824 = vpop.f32.mrb[0].mxu0
    %v825 = vadd.f32 %v771, %v824
    %v826 = vpop.f32.mrb[0].mxu0
    %827 = vdwg.mxu0
    %v828 = vmul.f32 %v822, %v822
    %v829 = vmul.f32 %v825, %v825
    %v830 = vmul.f32 %v822, %v828
    %v831 = vmul.f32 %v825, %v829
    %v832 = vmul.f32 %v830, 0.044715
    %v833 = vmul.f32 %v831, 0.044715
    %v834 = vadd.f32 %v822, %v832
    %v835 = vadd.f32 %v825, %v833
    %v836 = vmul.f32 %v834, 0.7978846
    %v837 = vmul.f32 %v835, 0.7978846
    %v838 = vtanh.pop %v836
    %v839 = vtanh.pop %v837
    %v840 = vadd.f32 %v838, 1.0
    %v841 = vadd.f32 %v839, 1.0
    %v842 = vmul.f32 %v840, 0.5
    %v843 = vmul.f32 %v841, 0.5
    %v844 = vmul.f32 %v822, %v842
    %v845 = vmul.f32 %v825, %v843
    %v846 = vpack.c.bf16 %v845, %v844
    %v847 = vlaneseq
    %v848 = vshrl.u32 %v847, 7
    %v849 = vsub.s32 5, %v848
    %v850 = vrot.slane %v141, %v849
    %v859 = vunpack.c.l.b16 %v133
    %v860 = vunpack.c.l.b16 %v134
    %v861 = vunpack.c.l.b16 %v135
    %v862 = vunpack.c.l.b16 %v136
    %v863 = vunpack.c.l.b16 %v137
    %v864 = vunpack.c.l.b16 %v138
    %v865 = vunpack.c.l.b16 %v139
    %v866 = vunpack.c.l.b16 %v140
    %v867 = vpack.c.b16 %v860, %v859
    %v868 = vpack.c.b16 %v862, %v861
    %v869 = vpack.c.b16 %v864, %v863
    %v870 = vpack.c.b16 %v866, %v865
    %vm875 = vcmask 523264
    %v877 = vsel %vm875, %v846, 0
    %879 = vmatprep.subr.bf16.mxu0 0
    %880 = vmatpush1.bf16.msra.mxu0 %v867
    %881 = vmatprep.subr.bf16.mxu0 0
    %882 = vmatpush1.bf16.msra.mxu0 %v868
    %883 = vmatprep.subr.bf16.mxu0 0
    %884 = vmatpush1.bf16.msra.mxu0 %v869
    %885 = vmatprep.subr.bf16.mxu0 0
    %886 = vmatpush1.bf16.msra.mxu0 %v870
    %887 = vmatprep.subr.bf16.mxu0 0
    %888 = vmatpush1.bf16.msra.mxu0 0
    %889 = vmatprep.subr.bf16.mxu0 0
    %890 = vmatpush1.bf16.msra.mxu0 0
    %891 = vmatprep.subr.bf16.mxu0 0
    %892 = vmatpush1.bf16.msra.mxu0 0
    %893 = vmatprep.subr.bf16.mxu0 0
    %894 = vmatpush1.bf16.msra.mxu0 0
    %895 = vmatprep.subr.bf16.mxu0 0
    %896 = vmatpush1.bf16.msra.mxu0 0
    %897 = vmatprep.subr.bf16.mxu0 0
    %898 = vmatpush1.bf16.msra.mxu0 0
    %899 = vmatprep.subr.bf16.mxu0 0
    %900 = vmatpush1.bf16.msra.mxu0 0
    %901 = vmatprep.subr.bf16.mxu0 0
    %902 = vmatpush1.bf16.msra.mxu0 0
    %903 = vmatprep.subr.bf16.mxu0 0
    %904 = vmatpush1.bf16.msra.mxu0 0
    %905 = vmatprep.subr.bf16.mxu0 0
    %906 = vmatpush1.bf16.msra.mxu0 0
    %907 = vmatprep.subr.bf16.mxu0 0
    %908 = vmatpush1.bf16.msra.mxu0 0
    %909 = vmatprep.subr.bf16.mxu0 0
    %910 = vmatpush1.bf16.msra.mxu0 0
    %911 = vmatprep.mubr.bf16.mxu0 0
    %912 = vmatmul.mubr.bf16.gmra.mrb[0].mxu0 %v877
    %v913 = vpop.f32.mrb[0].mxu0
    %v914 = vadd.f32 %v850, %v913
    %v915 = vpop.f32.mrb[0].mxu0
    %v916 = vpop.f32.mrb[0].mxu0
    %v917 = vadd.f32 %v850, %v916
    %v918 = vpop.f32.mrb[0].mxu0
    %919 = vdwg.mxu0
    %v920 = vadd.f32 %v765, %v914
    %v921 = vadd.f32 %v766, %v917
    %v922 = vsel %vm49, %v920, 0.0
    %923 = vadd.xlane.f32.xlu0 %v922
    %v924 = vpop.xlane.xlu0 %923
    %v925 = vsel %vm49, %v921, 0.0
    %926 = vadd.xlane.f32.xlu0 %v925
    %v927 = vpop.xlane.xlu0 %926
    %v928 = vmul.f32 %v924, %v56
    %v929 = vmul.f32 %v927, %v56
    %v930 = vsub.f32 %v920, %v928
    %v931 = vsub.f32 %v921, %v929
    %v932 = vmul.f32 %v930, %v930
    %v933 = vmul.f32 %v931, %v931
    %v934 = vsel %vm49, %v932, 0.0
    %935 = vadd.xlane.f32.xlu0 %v934
    %v936 = vpop.xlane.xlu0 %935
    %v937 = vsel %vm49, %v933, 0.0
    %938 = vadd.xlane.f32.xlu0 %v937
    %v939 = vpop.xlane.xlu0 %938
    %v940 = vmul.f32 %v936, %v56
    %v941 = vmul.f32 %v939, %v56
    %v942 = vadd.f32 %v940, 1e-12
    %v943 = vadd.f32 %v941, 1e-12
    %v944 = vrsqrt.pop %v942
    %v945 = vrsqrt.pop %v943
    %v946 = vmul.f32 %v930, %v944
    %v947 = vmul.f32 %v931, %v945
    %v948 = vlaneseq
    %v949 = vshrl.u32 %v948, 7
    %v950 = vsub.s32 6, %v949
    %v951 = vrot.slane %v141, %v950
    %v952 = vmul.f32 %v946, %v951
    %v953 = vmul.f32 %v947, %v951
    %v954 = vlaneseq
    %v955 = vshrl.u32 %v954, 7
    %v956 = vsub.s32 7, %v955
    %v957 = vrot.slane %v141, %v956
    %v958 = vadd.f32 %v952, %v957
    %v959 = vadd.f32 %v953, %v957
    %s960 = scalar_lea.vmem %s2, 16
    %v961 = vld [vmem:[%s960] sm:$0xf]
    %v962 = vld [vmem:[%s960 + $0x4] sm:$0xf]
    %v963 = vld [vmem:[%s960 + $0x8] sm:$0xf]
    %v964 = vld [vmem:[%s960 + $0xc] sm:$0xf]
    %s965 = scalar_lea.vmem %s3, 16
    %v966 = vld [vmem:[%s965] sm:$0xf]
    %v967 = vld [vmem:[%s965 + $0x4] sm:$0xf]
    %v968 = vld [vmem:[%s965 + $0x8] sm:$0xf]
    %v969 = vld [vmem:[%s965 + $0xc] sm:$0xf]
    %s970 = scalar_lea.vmem %s4, 32
    %v971 = vld [vmem:[%s970] sm:$0xf]
    %v972 = vld [vmem:[%s970 + $0x4] sm:$0xf]
    %v973 = vld [vmem:[%s970 + $0x8] sm:$0xf]
    %v974 = vld [vmem:[%s970 + $0xc] sm:$0xf]
    %v975 = vld [vmem:[%s970 + $0x10] sm:$0xf]
    %v976 = vld [vmem:[%s970 + $0x14] sm:$0xf]
    %v977 = vld [vmem:[%s970 + $0x18] sm:$0xf]
    %v978 = vld [vmem:[%s970 + $0x1c] sm:$0xf]
    %s979 = scalar_lea.vmem %s5, 8
    %v980 = vld [vmem:[%s979] sm:$0xff]
    %v981 = vpack.c.bf16 %v959, %v958
    %v982 = vlaneseq
    %v983 = vshrl.u32 %v982, 7
    %v984 = vsub.s32 0, %v983
    %v985 = vrot.slane %v980, %v984
    %v990 = vunpack.c.l.b16 %v961
    %v991 = vunpack.c.l.b16 %v962
    %v992 = vunpack.c.l.b16 %v963
    %v993 = vunpack.c.l.b16 %v964
    %v994 = vpack.c.b16 %v991, %v990
    %v995 = vpack.c.b16 %v993, %v992
    %v999 = vsel %vm49, %v981, 0
    %1001 = vmatprep.subr.bf16.mxu0 0
    %1002 = vmatpush1.bf16.msra.mxu0 %v994
    %1003 = vmatprep.subr.bf16.mxu0 0
    %1004 = vmatpush1.bf16.msra.mxu0 %v995
    %1005 = vmatprep.subr.bf16.mxu0 0
    %1006 = vmatpush1.bf16.msra.mxu0 0
    %1007 = vmatprep.subr.bf16.mxu0 0
    %1008 = vmatpush1.bf16.msra.mxu0 0
    %1009 = vmatprep.subr.bf16.mxu0 0
    %1010 = vmatpush1.bf16.msra.mxu0 0
    %1011 = vmatprep.subr.bf16.mxu0 0
    %1012 = vmatpush1.bf16.msra.mxu0 0
    %1013 = vmatprep.subr.bf16.mxu0 0
    %1014 = vmatpush1.bf16.msra.mxu0 0
    %1015 = vmatprep.subr.bf16.mxu0 0
    %1016 = vmatpush1.bf16.msra.mxu0 0
    %1017 = vmatprep.subr.bf16.mxu0 0
    %1018 = vmatpush1.bf16.msra.mxu0 0
    %1019 = vmatprep.subr.bf16.mxu0 0
    %1020 = vmatpush1.bf16.msra.mxu0 0
    %1021 = vmatprep.subr.bf16.mxu0 0
    %1022 = vmatpush1.bf16.msra.mxu0 0
    %1023 = vmatprep.subr.bf16.mxu0 0
    %1024 = vmatpush1.bf16.msra.mxu0 0
    %1025 = vmatprep.subr.bf16.mxu0 0
    %1026 = vmatpush1.bf16.msra.mxu0 0
    %1027 = vmatprep.subr.bf16.mxu0 0
    %1028 = vmatpush1.bf16.msra.mxu0 0
    %1029 = vmatprep.subr.bf16.mxu0 0
    %1030 = vmatpush1.bf16.msra.mxu0 0
    %1031 = vmatprep.subr.bf16.mxu0 0
    %1032 = vmatpush1.bf16.msra.mxu0 0
    %1033 = vmatprep.mubr.bf16.mxu0 0
    %1034 = vmatmul.mubr.bf16.gmra.mrb[0].mxu0 %v999
    %v1035 = vpop.f32.mrb[0].mxu0
    %v1036 = vadd.f32 %v985, %v1035
    %v1037 = vpop.f32.mrb[0].mxu0
    %v1038 = vpop.f32.mrb[0].mxu0
    %v1039 = vadd.f32 %v985, %v1038
    %v1040 = vpop.f32.mrb[0].mxu0
    %1041 = vdwg.mxu0
    %1044 = vrot.lane.b32.xlu0 %v1036, 112
    %v1045 = vpop.permute.xlu0 %1044
    %1046 = vrot.lane.b32.xlu0 %v1039, 112
    %v1047 = vpop.permute.xlu0 %1046
    %v1050 = vpack.c.bf16 %v1036, %v1036
    %v1051 = vpack.c.bf16 %v1039, %v1039
    %v1052 = vpack.c.bf16 %v1045, %v1045
    %v1053 = vpack.c.bf16 %v1047, %v1047
    %1055 = vrot.lane.b32.xlu0 %v1050, 96
    %v1056 = vpop.permute.xlu0 %1055
    %v1058 = vsel %vm218, %v1050, 0
    %v1061 = vsel %vm218, %v1056, 0
    %1063 = vmatprep.subr.bf16.mxu0 0
    %1064 = vmatpush1.bf16.xpose.msra.mxu0 %v1061
    %1065 = vmatprep.subr.bf16.mxu0 0
    %1066 = vmatpush1.bf16.xpose.msra.mxu0 0
    %1067 = vmatprep.subr.bf16.mxu0 0
    %1068 = vmatpush1.bf16.xpose.msra.mxu0 0
    %1069 = vmatprep.subr.bf16.mxu0 0
    %1070 = vmatpush1.bf16.xpose.msra.mxu0 0
    %1071 = vmatprep.subr.bf16.mxu0 0
    %1072 = vmatpush1.bf16.xpose.msra.mxu0 0
    %1073 = vmatprep.subr.bf16.mxu0 0
    %1074 = vmatpush1.bf16.xpose.msra.mxu0 0
    %1075 = vmatprep.subr.bf16.mxu0 0
    %1076 = vmatpush1.bf16.xpose.msra.mxu0 0
    %1077 = vmatprep.subr.bf16.mxu0 0
    %1078 = vmatpush1.bf16.xpose.msra.mxu0 0
    %1079 = vmatprep.subr.bf16.mxu0 0
    %1080 = vmatpush1.bf16.xpose.msra.mxu0 0
    %1081 = vmatprep.subr.bf16.mxu0 0
    %1082 = vmatpush1.bf16.xpose.msra.mxu0 0
    %1083 = vmatprep.subr.bf16.mxu0 0
    %1084 = vmatpush1.bf16.xpose.msra.mxu0 0
    %1085 = vmatprep.subr.bf16.mxu0 0
    %1086 = vmatpush1.bf16.xpose.msra.mxu0 0
    %1087 = vmatprep.subr.bf16.mxu0 0
    %1088 = vmatpush1.bf16.xpose.msra.mxu0 0
    %1089 = vmatprep.subr.bf16.mxu0 0
    %1090 = vmatpush1.bf16.xpose.msra.mxu0 0
    %1091 = vmatprep.subr.bf16.mxu0 0
    %1092 = vmatpush1.bf16.xpose.msra.mxu0 0
    %1093 = vmatprep.subr.bf16.mxu0 0
    %1094 = vmatpush1.bf16.xpose.msra.mxu0 0
    %1095 = vmatprep.mubr.bf16.mxu0 0
    %1096 = vmatmul.mubr.bf16.gmra.mrb[0].mxu0 %v1058
    %v1097 = vpop.f32.mrb[0].mxu0
    %v1098 = vadd.f32 0.0, %v1097
    %v1099 = vpop.f32.mrb[0].mxu0
    %v1100 = vpop.f32.mrb[0].mxu0
    %v1101 = vpop.f32.mrb[0].mxu0
    %1102 = vdwg.mxu0
    %1104 = vrot.lane.b32.xlu0 %v1051, 96
    %v1105 = vpop.permute.xlu0 %1104
    %v1107 = vsel %vm218, %v1051, 0
    %v1110 = vsel %vm218, %v1105, 0
    %1112 = vmatprep.subr.bf16.mxu0 0
    %1113 = vmatpush1.bf16.xpose.msra.mxu0 %v1110
    %1114 = vmatprep.subr.bf16.mxu0 0
    %1115 = vmatpush1.bf16.xpose.msra.mxu0 0
    %1116 = vmatprep.subr.bf16.mxu0 0
    %1117 = vmatpush1.bf16.xpose.msra.mxu0 0
    %1118 = vmatprep.subr.bf16.mxu0 0
    %1119 = vmatpush1.bf16.xpose.msra.mxu0 0
    %1120 = vmatprep.subr.bf16.mxu0 0
    %1121 = vmatpush1.bf16.xpose.msra.mxu0 0
    %1122 = vmatprep.subr.bf16.mxu0 0
    %1123 = vmatpush1.bf16.xpose.msra.mxu0 0
    %1124 = vmatprep.subr.bf16.mxu0 0
    %1125 = vmatpush1.bf16.xpose.msra.mxu0 0
    %1126 = vmatprep.subr.bf16.mxu0 0
    %1127 = vmatpush1.bf16.xpose.msra.mxu0 0
    %1128 = vmatprep.subr.bf16.mxu0 0
    %1129 = vmatpush1.bf16.xpose.msra.mxu0 0
    %1130 = vmatprep.subr.bf16.mxu0 0
    %1131 = vmatpush1.bf16.xpose.msra.mxu0 0
    %1132 = vmatprep.subr.bf16.mxu0 0
    %1133 = vmatpush1.bf16.xpose.msra.mxu0 0
    %1134 = vmatprep.subr.bf16.mxu0 0
    %1135 = vmatpush1.bf16.xpose.msra.mxu0 0
    %1136 = vmatprep.subr.bf16.mxu0 0
    %1137 = vmatpush1.bf16.xpose.msra.mxu0 0
    %1138 = vmatprep.subr.bf16.mxu0 0
    %1139 = vmatpush1.bf16.xpose.msra.mxu0 0
    %1140 = vmatprep.subr.bf16.mxu0 0
    %1141 = vmatpush1.bf16.xpose.msra.mxu0 0
    %1142 = vmatprep.subr.bf16.mxu0 0
    %1143 = vmatpush1.bf16.xpose.msra.mxu0 0
    %1144 = vmatprep.mubr.bf16.mxu0 0
    %1145 = vmatmul.mubr.bf16.gmra.mrb[0].mxu0 %v1107
    %v1146 = vpop.f32.mrb[0].mxu0
    %v1147 = vadd.f32 0.0, %v1146
    %v1148 = vpop.f32.mrb[0].mxu0
    %v1149 = vpop.f32.mrb[0].mxu0
    %v1150 = vpop.f32.mrb[0].mxu0
    %1151 = vdwg.mxu0
    %1153 = vrot.lane.b32.xlu0 %v1052, 96
    %v1154 = vpop.permute.xlu0 %1153
    %v1156 = vsel %vm218, %v1052, 0
    %v1159 = vsel %vm218, %v1154, 0
    %1161 = vmatprep.subr.bf16.mxu0 0
    %1162 = vmatpush1.bf16.xpose.msra.mxu0 %v1159
    %1163 = vmatprep.subr.bf16.mxu0 0
    %1164 = vmatpush1.bf16.xpose.msra.mxu0 0
    %1165 = vmatprep.subr.bf16.mxu0 0
    %1166 = vmatpush1.bf16.xpose.msra.mxu0 0
    %1167 = vmatprep.subr.bf16.mxu0 0
    %1168 = vmatpush1.bf16.xpose.msra.mxu0 0
    %1169 = vmatprep.subr.bf16.mxu0 0
    %1170 = vmatpush1.bf16.xpose.msra.mxu0 0
    %1171 = vmatprep.subr.bf16.mxu0 0
    %1172 = vmatpush1.bf16.xpose.msra.mxu0 0
    %1173 = vmatprep.subr.bf16.mxu0 0
    %1174 = vmatpush1.bf16.xpose.msra.mxu0 0
    %1175 = vmatprep.subr.bf16.mxu0 0
    %1176 = vmatpush1.bf16.xpose.msra.mxu0 0
    %1177 = vmatprep.subr.bf16.mxu0 0
    %1178 = vmatpush1.bf16.xpose.msra.mxu0 0
    %1179 = vmatprep.subr.bf16.mxu0 0
    %1180 = vmatpush1.bf16.xpose.msra.mxu0 0
    %1181 = vmatprep.subr.bf16.mxu0 0
    %1182 = vmatpush1.bf16.xpose.msra.mxu0 0
    %1183 = vmatprep.subr.bf16.mxu0 0
    %1184 = vmatpush1.bf16.xpose.msra.mxu0 0
    %1185 = vmatprep.subr.bf16.mxu0 0
    %1186 = vmatpush1.bf16.xpose.msra.mxu0 0
    %1187 = vmatprep.subr.bf16.mxu0 0
    %1188 = vmatpush1.bf16.xpose.msra.mxu0 0
    %1189 = vmatprep.subr.bf16.mxu0 0
    %1190 = vmatpush1.bf16.xpose.msra.mxu0 0
    %1191 = vmatprep.subr.bf16.mxu0 0
    %1192 = vmatpush1.bf16.xpose.msra.mxu0 0
    %1193 = vmatprep.mubr.bf16.mxu0 0
    %1194 = vmatmul.mubr.bf16.gmra.mrb[0].mxu0 %v1156
    %v1195 = vpop.f32.mrb[0].mxu0
    %v1196 = vadd.f32 0.0, %v1195
    %v1197 = vpop.f32.mrb[0].mxu0
    %v1198 = vpop.f32.mrb[0].mxu0
    %v1199 = vpop.f32.mrb[0].mxu0
    %1200 = vdwg.mxu0
    %1202 = vrot.lane.b32.xlu0 %v1053, 96
    %v1203 = vpop.permute.xlu0 %1202
    %v1205 = vsel %vm218, %v1053, 0
    %v1208 = vsel %vm218, %v1203, 0
    %1210 = vmatprep.subr.bf16.mxu0 0
    %1211 = vmatpush1.bf16.xpose.msra.mxu0 %v1208
    %1212 = vmatprep.subr.bf16.mxu0 0
    %1213 = vmatpush1.bf16.xpose.msra.mxu0 0
    %1214 = vmatprep.subr.bf16.mxu0 0
    %1215 = vmatpush1.bf16.xpose.msra.mxu0 0
    %1216 = vmatprep.subr.bf16.mxu0 0
    %1217 = vmatpush1.bf16.xpose.msra.mxu0 0
    %1218 = vmatprep.subr.bf16.mxu0 0
    %1219 = vmatpush1.bf16.xpose.msra.mxu0 0
    %1220 = vmatprep.subr.bf16.mxu0 0
    %1221 = vmatpush1.bf16.xpose.msra.mxu0 0
    %1222 = vmatprep.subr.bf16.mxu0 0
    %1223 = vmatpush1.bf16.xpose.msra.mxu0 0
    %1224 = vmatprep.subr.bf16.mxu0 0
    %1225 = vmatpush1.bf16.xpose.msra.mxu0 0
    %1226 = vmatprep.subr.bf16.mxu0 0
    %1227 = vmatpush1.bf16.xpose.msra.mxu0 0
    %1228 = vmatprep.subr.bf16.mxu0 0
    %1229 = vmatpush1.bf16.xpose.msra.mxu0 0
    %1230 = vmatprep.subr.bf16.mxu0 0
    %1231 = vmatpush1.bf16.xpose.msra.mxu0 0
    %1232 = vmatprep.subr.bf16.mxu0 0
    %1233 = vmatpush1.bf16.xpose.msra.mxu0 0
    %1234 = vmatprep.subr.bf16.mxu0 0
    %1235 = vmatpush1.bf16.xpose.msra.mxu0 0
    %1236 = vmatprep.subr.bf16.mxu0 0
    %1237 = vmatpush1.bf16.xpose.msra.mxu0 0
    %1238 = vmatprep.subr.bf16.mxu0 0
    %1239 = vmatpush1.bf16.xpose.msra.mxu0 0
    %1240 = vmatprep.subr.bf16.mxu0 0
    %1241 = vmatpush1.bf16.xpose.msra.mxu0 0
    %1242 = vmatprep.mubr.bf16.mxu0 0
    %1243 = vmatmul.mubr.bf16.gmra.mrb[0].mxu0 %v1205
    %v1244 = vpop.f32.mrb[0].mxu0
    %v1245 = vadd.f32 0.0, %v1244
    %v1246 = vpop.f32.mrb[0].mxu0
    %v1247 = vpop.f32.mrb[0].mxu0
    %v1248 = vpop.f32.mrb[0].mxu0
    %1249 = vdwg.mxu0
    %v1250 = vmul.f32 %v1098, 0.25
    %v1251 = vmul.f32 %v1147, 0.25
    %v1252 = vmul.f32 %v1196, 0.25
    %v1253 = vmul.f32 %v1245, 0.25
    %v1254 = vadd.f32 %v1250, %v118
    %v1255 = vadd.f32 %v1251, %v122
    %v1256 = vadd.f32 %v1252, %v118
    %v1257 = vadd.f32 %v1253, %v122
    %v1258 = vsel %vm420, %v1254, -inf
    %1259 = vmax.xlane.f32.xlu0 %v1258
    %v1260 = vpop.xlane.xlu0 %1259
    %v1261 = vsel %vm420, %v1255, -inf
    %1262 = vmax.xlane.f32.xlu0 %v1261
    %v1263 = vpop.xlane.xlu0 %1262
    %v1264 = vsel %vm420, %v1256, -inf
    %1265 = vmax.xlane.f32.xlu0 %v1264
    %v1266 = vpop.xlane.xlu0 %1265
    %v1267 = vsel %vm420, %v1257, -inf
    %1268 = vmax.xlane.f32.xlu0 %v1267
    %v1269 = vpop.xlane.xlu0 %1268
    %v1270 = vsub.f32 %v1254, %v1260
    %v1271 = vsub.f32 %v1255, %v1263
    %v1272 = vsub.f32 %v1256, %v1266
    %v1273 = vsub.f32 %v1257, %v1269
    %v1274 = vmul.f32 %v1270, 1.442695
    %v1275 = vpow.pop %v1274
    %v1276 = vmul.f32 %v1271, 1.442695
    %v1277 = vpow.pop %v1276
    %v1278 = vmul.f32 %v1272, 1.442695
    %v1279 = vpow.pop %v1278
    %v1280 = vmul.f32 %v1273, 1.442695
    %v1281 = vpow.pop %v1280
    %v1282 = vsel %vm420, %v1275, 0.0
    %1283 = vadd.xlane.f32.xlu0 %v1282
    %v1284 = vpop.xlane.xlu0 %1283
    %v1285 = vsel %vm420, %v1277, 0.0
    %1286 = vadd.xlane.f32.xlu0 %v1285
    %v1287 = vpop.xlane.xlu0 %1286
    %v1288 = vsel %vm420, %v1279, 0.0
    %1289 = vadd.xlane.f32.xlu0 %v1288
    %v1290 = vpop.xlane.xlu0 %1289
    %v1291 = vsel %vm420, %v1281, 0.0
    %1292 = vadd.xlane.f32.xlu0 %v1291
    %v1293 = vpop.xlane.xlu0 %1292
    %v1294 = vrcp.pop %v1284
    %v1295 = vmul.f32 %v1275, %v1294
    %v1296 = vrcp.pop %v1287
    %v1297 = vmul.f32 %v1277, %v1296
    %v1298 = vrcp.pop %v1290
    %v1299 = vmul.f32 %v1279, %v1298
    %v1300 = vrcp.pop %v1293
    %v1301 = vmul.f32 %v1281, %v1300
    %v1302 = vpack.c.bf16 %v1295, %v1295
    %v1303 = vpack.c.bf16 %v1297, %v1297
    %v1304 = vpack.c.bf16 %v1299, %v1299
    %v1305 = vpack.c.bf16 %v1301, %v1301
    %1306 = vrot.lane.b32.xlu0 %v1050, 64
    %v1307 = vpop.permute.xlu0 %1306
    %v1309 = vsel %vm420, %v1302, 0
    %v1312 = vsel %vm474, %v1307, 0
    %1314 = vmatprep.subr.bf16.mxu0 0
    %1315 = vmatpush1.bf16.msra.mxu0 %v1312
    %1316 = vmatprep.subr.bf16.mxu0 0
    %1317 = vmatpush1.bf16.msra.mxu0 0
    %1318 = vmatprep.subr.bf16.mxu0 0
    %1319 = vmatpush1.bf16.msra.mxu0 0
    %1320 = vmatprep.subr.bf16.mxu0 0
    %1321 = vmatpush1.bf16.msra.mxu0 0
    %1322 = vmatprep.subr.bf16.mxu0 0
    %1323 = vmatpush1.bf16.msra.mxu0 0
    %1324 = vmatprep.subr.bf16.mxu0 0
    %1325 = vmatpush1.bf16.msra.mxu0 0
    %1326 = vmatprep.subr.bf16.mxu0 0
    %1327 = vmatpush1.bf16.msra.mxu0 0
    %1328 = vmatprep.subr.bf16.mxu0 0
    %1329 = vmatpush1.bf16.msra.mxu0 0
    %1330 = vmatprep.subr.bf16.mxu0 0
    %1331 = vmatpush1.bf16.msra.mxu0 0
    %1332 = vmatprep.subr.bf16.mxu0 0
    %1333 = vmatpush1.bf16.msra.mxu0 0
    %1334 = vmatprep.subr.bf16.mxu0 0
    %1335 = vmatpush1.bf16.msra.mxu0 0
    %1336 = vmatprep.subr.bf16.mxu0 0
    %1337 = vmatpush1.bf16.msra.mxu0 0
    %1338 = vmatprep.subr.bf16.mxu0 0
    %1339 = vmatpush1.bf16.msra.mxu0 0
    %1340 = vmatprep.subr.bf16.mxu0 0
    %1341 = vmatpush1.bf16.msra.mxu0 0
    %1342 = vmatprep.subr.bf16.mxu0 0
    %1343 = vmatpush1.bf16.msra.mxu0 0
    %1344 = vmatprep.subr.bf16.mxu0 0
    %1345 = vmatpush1.bf16.msra.mxu0 0
    %1346 = vmatprep.mubr.bf16.mxu0 0
    %1347 = vmatmul.mubr.bf16.gmra.mrb[0].mxu0 %v1309
    %v1348 = vpop.f32.mrb[0].mxu0
    %v1349 = vadd.f32 0.0, %v1348
    %v1350 = vpop.f32.mrb[0].mxu0
    %v1351 = vpop.f32.mrb[0].mxu0
    %v1352 = vpop.f32.mrb[0].mxu0
    %1353 = vdwg.mxu0
    %1354 = vrot.lane.b32.xlu0 %v1051, 64
    %v1355 = vpop.permute.xlu0 %1354
    %v1357 = vsel %vm420, %v1303, 0
    %v1360 = vsel %vm474, %v1355, 0
    %1362 = vmatprep.subr.bf16.mxu0 0
    %1363 = vmatpush1.bf16.msra.mxu0 %v1360
    %1364 = vmatprep.subr.bf16.mxu0 0
    %1365 = vmatpush1.bf16.msra.mxu0 0
    %1366 = vmatprep.subr.bf16.mxu0 0
    %1367 = vmatpush1.bf16.msra.mxu0 0
    %1368 = vmatprep.subr.bf16.mxu0 0
    %1369 = vmatpush1.bf16.msra.mxu0 0
    %1370 = vmatprep.subr.bf16.mxu0 0
    %1371 = vmatpush1.bf16.msra.mxu0 0
    %1372 = vmatprep.subr.bf16.mxu0 0
    %1373 = vmatpush1.bf16.msra.mxu0 0
    %1374 = vmatprep.subr.bf16.mxu0 0
    %1375 = vmatpush1.bf16.msra.mxu0 0
    %1376 = vmatprep.subr.bf16.mxu0 0
    %1377 = vmatpush1.bf16.msra.mxu0 0
    %1378 = vmatprep.subr.bf16.mxu0 0
    %1379 = vmatpush1.bf16.msra.mxu0 0
    %1380 = vmatprep.subr.bf16.mxu0 0
    %1381 = vmatpush1.bf16.msra.mxu0 0
    %1382 = vmatprep.subr.bf16.mxu0 0
    %1383 = vmatpush1.bf16.msra.mxu0 0
    %1384 = vmatprep.subr.bf16.mxu0 0
    %1385 = vmatpush1.bf16.msra.mxu0 0
    %1386 = vmatprep.subr.bf16.mxu0 0
    %1387 = vmatpush1.bf16.msra.mxu0 0
    %1388 = vmatprep.subr.bf16.mxu0 0
    %1389 = vmatpush1.bf16.msra.mxu0 0
    %1390 = vmatprep.subr.bf16.mxu0 0
    %1391 = vmatpush1.bf16.msra.mxu0 0
    %1392 = vmatprep.subr.bf16.mxu0 0
    %1393 = vmatpush1.bf16.msra.mxu0 0
    %1394 = vmatprep.mubr.bf16.mxu0 0
    %1395 = vmatmul.mubr.bf16.gmra.mrb[0].mxu0 %v1357
    %v1396 = vpop.f32.mrb[0].mxu0
    %v1397 = vadd.f32 0.0, %v1396
    %v1398 = vpop.f32.mrb[0].mxu0
    %v1399 = vpop.f32.mrb[0].mxu0
    %v1400 = vpop.f32.mrb[0].mxu0
    %1401 = vdwg.mxu0
    %1402 = vrot.lane.b32.xlu0 %v1052, 64
    %v1403 = vpop.permute.xlu0 %1402
    %v1405 = vsel %vm420, %v1304, 0
    %v1408 = vsel %vm474, %v1403, 0
    %1410 = vmatprep.subr.bf16.mxu0 0
    %1411 = vmatpush1.bf16.msra.mxu0 %v1408
    %1412 = vmatprep.subr.bf16.mxu0 0
    %1413 = vmatpush1.bf16.msra.mxu0 0
    %1414 = vmatprep.subr.bf16.mxu0 0
    %1415 = vmatpush1.bf16.msra.mxu0 0
    %1416 = vmatprep.subr.bf16.mxu0 0
    %1417 = vmatpush1.bf16.msra.mxu0 0
    %1418 = vmatprep.subr.bf16.mxu0 0
    %1419 = vmatpush1.bf16.msra.mxu0 0
    %1420 = vmatprep.subr.bf16.mxu0 0
    %1421 = vmatpush1.bf16.msra.mxu0 0
    %1422 = vmatprep.subr.bf16.mxu0 0
    %1423 = vmatpush1.bf16.msra.mxu0 0
    %1424 = vmatprep.subr.bf16.mxu0 0
    %1425 = vmatpush1.bf16.msra.mxu0 0
    %1426 = vmatprep.subr.bf16.mxu0 0
    %1427 = vmatpush1.bf16.msra.mxu0 0
    %1428 = vmatprep.subr.bf16.mxu0 0
    %1429 = vmatpush1.bf16.msra.mxu0 0
    %1430 = vmatprep.subr.bf16.mxu0 0
    %1431 = vmatpush1.bf16.msra.mxu0 0
    %1432 = vmatprep.subr.bf16.mxu0 0
    %1433 = vmatpush1.bf16.msra.mxu0 0
    %1434 = vmatprep.subr.bf16.mxu0 0
    %1435 = vmatpush1.bf16.msra.mxu0 0
    %1436 = vmatprep.subr.bf16.mxu0 0
    %1437 = vmatpush1.bf16.msra.mxu0 0
    %1438 = vmatprep.subr.bf16.mxu0 0
    %1439 = vmatpush1.bf16.msra.mxu0 0
    %1440 = vmatprep.subr.bf16.mxu0 0
    %1441 = vmatpush1.bf16.msra.mxu0 0
    %1442 = vmatprep.mubr.bf16.mxu0 0
    %1443 = vmatmul.mubr.bf16.gmra.mrb[0].mxu0 %v1405
    %v1444 = vpop.f32.mrb[0].mxu0
    %v1445 = vadd.f32 0.0, %v1444
    %v1446 = vpop.f32.mrb[0].mxu0
    %v1447 = vpop.f32.mrb[0].mxu0
    %v1448 = vpop.f32.mrb[0].mxu0
    %1449 = vdwg.mxu0
    %1450 = vrot.lane.b32.xlu0 %v1053, 64
    %v1451 = vpop.permute.xlu0 %1450
    %v1453 = vsel %vm420, %v1305, 0
    %v1456 = vsel %vm474, %v1451, 0
    %1458 = vmatprep.subr.bf16.mxu0 0
    %1459 = vmatpush1.bf16.msra.mxu0 %v1456
    %1460 = vmatprep.subr.bf16.mxu0 0
    %1461 = vmatpush1.bf16.msra.mxu0 0
    %1462 = vmatprep.subr.bf16.mxu0 0
    %1463 = vmatpush1.bf16.msra.mxu0 0
    %1464 = vmatprep.subr.bf16.mxu0 0
    %1465 = vmatpush1.bf16.msra.mxu0 0
    %1466 = vmatprep.subr.bf16.mxu0 0
    %1467 = vmatpush1.bf16.msra.mxu0 0
    %1468 = vmatprep.subr.bf16.mxu0 0
    %1469 = vmatpush1.bf16.msra.mxu0 0
    %1470 = vmatprep.subr.bf16.mxu0 0
    %1471 = vmatpush1.bf16.msra.mxu0 0
    %1472 = vmatprep.subr.bf16.mxu0 0
    %1473 = vmatpush1.bf16.msra.mxu0 0
    %1474 = vmatprep.subr.bf16.mxu0 0
    %1475 = vmatpush1.bf16.msra.mxu0 0
    %1476 = vmatprep.subr.bf16.mxu0 0
    %1477 = vmatpush1.bf16.msra.mxu0 0
    %1478 = vmatprep.subr.bf16.mxu0 0
    %1479 = vmatpush1.bf16.msra.mxu0 0
    %1480 = vmatprep.subr.bf16.mxu0 0
    %1481 = vmatpush1.bf16.msra.mxu0 0
    %1482 = vmatprep.subr.bf16.mxu0 0
    %1483 = vmatpush1.bf16.msra.mxu0 0
    %1484 = vmatprep.subr.bf16.mxu0 0
    %1485 = vmatpush1.bf16.msra.mxu0 0
    %1486 = vmatprep.subr.bf16.mxu0 0
    %1487 = vmatpush1.bf16.msra.mxu0 0
    %1488 = vmatprep.subr.bf16.mxu0 0
    %1489 = vmatpush1.bf16.msra.mxu0 0
    %1490 = vmatprep.mubr.bf16.mxu0 0
    %1491 = vmatmul.mubr.bf16.gmra.mrb[0].mxu0 %v1453
    %v1492 = vpop.f32.mrb[0].mxu0
    %v1493 = vadd.f32 0.0, %v1492
    %v1494 = vpop.f32.mrb[0].mxu0
    %v1495 = vpop.f32.mrb[0].mxu0
    %v1496 = vpop.f32.mrb[0].mxu0
    %1497 = vdwg.mxu0
    %1500 = vrot.lane.b32.xlu0 %v1445, 16
    %v1501 = vpop.permute.xlu0 %1500
    %1502 = vrot.lane.b32.xlu0 %v1493, 16
    %v1503 = vpop.permute.xlu0 %1502
    %v1506 = vsel %vm218, %v1349, %v1501
    %v1507 = vsel %vm218, %v1397, %v1503
    %v1508 = vpack.c.bf16 %v1507, %v1506
    %v1509 = vlaneseq
    %v1510 = vshrl.u32 %v1509, 7
    %v1511 = vsub.s32 2, %v1510
    %v1512 = vrot.slane %v980, %v1511
    %1513 = vrot.lane.b32.xlu0 %v994, 32
    %v1514 = vpop.permute.xlu0 %1513
    %1515 = vrot.lane.b32.xlu0 %v995, 32
    %v1516 = vpop.permute.xlu0 %1515
    %v1520 = vsel %vm49, %v1508, 0
    %1522 = vmatprep.subr.bf16.mxu0 0
    %1523 = vmatpush1.bf16.msra.mxu0 %v1514
    %1524 = vmatprep.subr.bf16.mxu0 0
    %1525 = vmatpush1.bf16.msra.mxu0 %v1516
    %1526 = vmatprep.subr.bf16.mxu0 0
    %1527 = vmatpush1.bf16.msra.mxu0 0
    %1528 = vmatprep.subr.bf16.mxu0 0
    %1529 = vmatpush1.bf16.msra.mxu0 0
    %1530 = vmatprep.subr.bf16.mxu0 0
    %1531 = vmatpush1.bf16.msra.mxu0 0
    %1532 = vmatprep.subr.bf16.mxu0 0
    %1533 = vmatpush1.bf16.msra.mxu0 0
    %1534 = vmatprep.subr.bf16.mxu0 0
    %1535 = vmatpush1.bf16.msra.mxu0 0
    %1536 = vmatprep.subr.bf16.mxu0 0
    %1537 = vmatpush1.bf16.msra.mxu0 0
    %1538 = vmatprep.subr.bf16.mxu0 0
    %1539 = vmatpush1.bf16.msra.mxu0 0
    %1540 = vmatprep.subr.bf16.mxu0 0
    %1541 = vmatpush1.bf16.msra.mxu0 0
    %1542 = vmatprep.subr.bf16.mxu0 0
    %1543 = vmatpush1.bf16.msra.mxu0 0
    %1544 = vmatprep.subr.bf16.mxu0 0
    %1545 = vmatpush1.bf16.msra.mxu0 0
    %1546 = vmatprep.subr.bf16.mxu0 0
    %1547 = vmatpush1.bf16.msra.mxu0 0
    %1548 = vmatprep.subr.bf16.mxu0 0
    %1549 = vmatpush1.bf16.msra.mxu0 0
    %1550 = vmatprep.subr.bf16.mxu0 0
    %1551 = vmatpush1.bf16.msra.mxu0 0
    %1552 = vmatprep.subr.bf16.mxu0 0
    %1553 = vmatpush1.bf16.msra.mxu0 0
    %1554 = vmatprep.mubr.bf16.mxu0 0
    %1555 = vmatmul.mubr.bf16.gmra.mrb[0].mxu0 %v1520
    %v1556 = vpop.f32.mrb[0].mxu0
    %v1557 = vadd.f32 %v1512, %v1556
    %v1558 = vpop.f32.mrb[0].mxu0
    %v1559 = vpop.f32.mrb[0].mxu0
    %v1560 = vadd.f32 %v1512, %v1559
    %v1561 = vpop.f32.mrb[0].mxu0
    %1562 = vdwg.mxu0
    %v1563 = vadd.f32 %v958, %v1557
    %v1564 = vadd.f32 %v959, %v1560
    %v1565 = vsel %vm49, %v1563, 0.0
    %1566 = vadd.xlane.f32.xlu0 %v1565
    %v1567 = vpop.xlane.xlu0 %1566
    %v1568 = vsel %vm49, %v1564, 0.0
    %1569 = vadd.xlane.f32.xlu0 %v1568
    %v1570 = vpop.xlane.xlu0 %1569
    %v1571 = vmul.f32 %v1567, %v56
    %v1572 = vmul.f32 %v1570, %v56
    %v1573 = vsub.f32 %v1563, %v1571
    %v1574 = vsub.f32 %v1564, %v1572
    %v1575 = vmul.f32 %v1573, %v1573
    %v1576 = vmul.f32 %v1574, %v1574
    %v1577 = vsel %vm49, %v1575, 0.0
    %1578 = vadd.xlane.f32.xlu0 %v1577
    %v1579 = vpop.xlane.xlu0 %1578
    %v1580 = vsel %vm49, %v1576, 0.0
    %1581 = vadd.xlane.f32.xlu0 %v1580
    %v1582 = vpop.xlane.xlu0 %1581
    %v1583 = vmul.f32 %v1579, %v56
    %v1584 = vmul.f32 %v1582, %v56
    %v1585 = vadd.f32 %v1583, 1e-12
    %v1586 = vadd.f32 %v1584, 1e-12
    %v1587 = vrsqrt.pop %v1585
    %v1588 = vrsqrt.pop %v1586
    %v1589 = vmul.f32 %v1573, %v1587
    %v1590 = vmul.f32 %v1574, %v1588
    %v1591 = vlaneseq
    %v1592 = vshrl.u32 %v1591, 7
    %v1593 = vsub.s32 3, %v1592
    %v1594 = vrot.slane %v980, %v1593
    %v1595 = vmul.f32 %v1589, %v1594
    %v1596 = vmul.f32 %v1590, %v1594
    %v1597 = vlaneseq
    %v1598 = vshrl.u32 %v1597, 7
    %v1599 = vsub.s32 4, %v1598
    %v1600 = vrot.slane %v980, %v1599
    %v1601 = vadd.f32 %v1595, %v1600
    %v1602 = vadd.f32 %v1596, %v1600
    %v1603 = vpack.c.bf16 %v1602, %v1601
    %v1604 = vlaneseq
    %v1605 = vshrl.u32 %v1604, 7
    %v1606 = vsub.s32 1, %v1605
    %v1607 = vrot.slane %v980, %v1606
    %v1612 = vunpack.c.l.b16 %v966
    %v1613 = vunpack.c.l.b16 %v967
    %v1614 = vunpack.c.l.b16 %v968
    %v1615 = vunpack.c.l.b16 %v969
    %v1616 = vpack.c.b16 %v1613, %v1612
    %v1617 = vpack.c.b16 %v1615, %v1614
    %v1621 = vsel %vm49, %v1603, 0
    %1623 = vmatprep.subr.bf16.mxu0 0
    %1624 = vmatpush1.bf16.msra.mxu0 %v1616
    %1625 = vmatprep.subr.bf16.mxu0 0
    %1626 = vmatpush1.bf16.msra.mxu0 %v1617
    %1627 = vmatprep.subr.bf16.mxu0 0
    %1628 = vmatpush1.bf16.msra.mxu0 0
    %1629 = vmatprep.subr.bf16.mxu0 0
    %1630 = vmatpush1.bf16.msra.mxu0 0
    %1631 = vmatprep.subr.bf16.mxu0 0
    %1632 = vmatpush1.bf16.msra.mxu0 0
    %1633 = vmatprep.subr.bf16.mxu0 0
    %1634 = vmatpush1.bf16.msra.mxu0 0
    %1635 = vmatprep.subr.bf16.mxu0 0
    %1636 = vmatpush1.bf16.msra.mxu0 0
    %1637 = vmatprep.subr.bf16.mxu0 0
    %1638 = vmatpush1.bf16.msra.mxu0 0
    %1639 = vmatprep.subr.bf16.mxu0 0
    %1640 = vmatpush1.bf16.msra.mxu0 0
    %1641 = vmatprep.subr.bf16.mxu0 0
    %1642 = vmatpush1.bf16.msra.mxu0 0
    %1643 = vmatprep.subr.bf16.mxu0 0
    %1644 = vmatpush1.bf16.msra.mxu0 0
    %1645 = vmatprep.subr.bf16.mxu0 0
    %1646 = vmatpush1.bf16.msra.mxu0 0
    %1647 = vmatprep.subr.bf16.mxu0 0
    %1648 = vmatpush1.bf16.msra.mxu0 0
    %1649 = vmatprep.subr.bf16.mxu0 0
    %1650 = vmatpush1.bf16.msra.mxu0 0
    %1651 = vmatprep.subr.bf16.mxu0 0
    %1652 = vmatpush1.bf16.msra.mxu0 0
    %1653 = vmatprep.subr.bf16.mxu0 0
    %1654 = vmatpush1.bf16.msra.mxu0 0
    %1655 = vmatprep.mubr.bf16.mxu0 0
    %1656 = vmatmul.mubr.bf16.gmra.mrb[0].mxu0 %v1621
    %v1657 = vpop.f32.mrb[0].mxu0
    %v1658 = vadd.f32 %v1607, %v1657
    %v1659 = vpop.f32.mrb[0].mxu0
    %v1660 = vpop.f32.mrb[0].mxu0
    %v1661 = vadd.f32 %v1607, %v1660
    %v1662 = vpop.f32.mrb[0].mxu0
    %1663 = vdwg.mxu0
    %v1664 = vmul.f32 %v1658, %v1658
    %v1665 = vmul.f32 %v1661, %v1661
    %v1666 = vmul.f32 %v1658, %v1664
    %v1667 = vmul.f32 %v1661, %v1665
    %v1668 = vmul.f32 %v1666, 0.044715
    %v1669 = vmul.f32 %v1667, 0.044715
    %v1670 = vadd.f32 %v1658, %v1668
    %v1671 = vadd.f32 %v1661, %v1669
    %v1672 = vmul.f32 %v1670, 0.7978846
    %v1673 = vmul.f32 %v1671, 0.7978846
    %v1674 = vtanh.pop %v1672
    %v1675 = vtanh.pop %v1673
    %v1676 = vadd.f32 %v1674, 1.0
    %v1677 = vadd.f32 %v1675, 1.0
    %v1678 = vmul.f32 %v1676, 0.5
    %v1679 = vmul.f32 %v1677, 0.5
    %v1680 = vmul.f32 %v1658, %v1678
    %v1681 = vmul.f32 %v1661, %v1679
    %v1682 = vpack.c.bf16 %v1681, %v1680
    %v1683 = vlaneseq
    %v1684 = vshrl.u32 %v1683, 7
    %v1685 = vsub.s32 5, %v1684
    %v1686 = vrot.slane %v980, %v1685
    %v1695 = vunpack.c.l.b16 %v971
    %v1696 = vunpack.c.l.b16 %v972
    %v1697 = vunpack.c.l.b16 %v973
    %v1698 = vunpack.c.l.b16 %v974
    %v1699 = vunpack.c.l.b16 %v975
    %v1700 = vunpack.c.l.b16 %v976
    %v1701 = vunpack.c.l.b16 %v977
    %v1702 = vunpack.c.l.b16 %v978
    %v1703 = vpack.c.b16 %v1696, %v1695
    %v1704 = vpack.c.b16 %v1698, %v1697
    %v1705 = vpack.c.b16 %v1700, %v1699
    %v1706 = vpack.c.b16 %v1702, %v1701
    %v1712 = vsel %vm875, %v1682, 0
    %1714 = vmatprep.subr.bf16.mxu0 0
    %1715 = vmatpush1.bf16.msra.mxu0 %v1703
    %1716 = vmatprep.subr.bf16.mxu0 0
    %1717 = vmatpush1.bf16.msra.mxu0 %v1704
    %1718 = vmatprep.subr.bf16.mxu0 0
    %1719 = vmatpush1.bf16.msra.mxu0 %v1705
    %1720 = vmatprep.subr.bf16.mxu0 0
    %1721 = vmatpush1.bf16.msra.mxu0 %v1706
    %1722 = vmatprep.subr.bf16.mxu0 0
    %1723 = vmatpush1.bf16.msra.mxu0 0
    %1724 = vmatprep.subr.bf16.mxu0 0
    %1725 = vmatpush1.bf16.msra.mxu0 0
    %1726 = vmatprep.subr.bf16.mxu0 0
    %1727 = vmatpush1.bf16.msra.mxu0 0
    %1728 = vmatprep.subr.bf16.mxu0 0
    %1729 = vmatpush1.bf16.msra.mxu0 0
    %1730 = vmatprep.subr.bf16.mxu0 0
    %1731 = vmatpush1.bf16.msra.mxu0 0
    %1732 = vmatprep.subr.bf16.mxu0 0
    %1733 = vmatpush1.bf16.msra.mxu0 0
    %1734 = vmatprep.subr.bf16.mxu0 0
    %1735 = vmatpush1.bf16.msra.mxu0 0
    %1736 = vmatprep.subr.bf16.mxu0 0
    %1737 = vmatpush1.bf16.msra.mxu0 0
    %1738 = vmatprep.subr.bf16.mxu0 0
    %1739 = vmatpush1.bf16.msra.mxu0 0
    %1740 = vmatprep.subr.bf16.mxu0 0
    %1741 = vmatpush1.bf16.msra.mxu0 0
    %1742 = vmatprep.subr.bf16.mxu0 0
    %1743 = vmatpush1.bf16.msra.mxu0 0
    %1744 = vmatprep.subr.bf16.mxu0 0
    %1745 = vmatpush1.bf16.msra.mxu0 0
    %1746 = vmatprep.mubr.bf16.mxu0 0
    %1747 = vmatmul.mubr.bf16.gmra.mrb[0].mxu0 %v1712
    %v1748 = vpop.f32.mrb[0].mxu0
    %v1749 = vadd.f32 %v1686, %v1748
    %v1750 = vpop.f32.mrb[0].mxu0
    %v1751 = vpop.f32.mrb[0].mxu0
    %v1752 = vadd.f32 %v1686, %v1751
    %v1753 = vpop.f32.mrb[0].mxu0
    %1754 = vdwg.mxu0
    %v1755 = vadd.f32 %v1601, %v1749
    %v1756 = vadd.f32 %v1602, %v1752
    %v1757 = vsel %vm49, %v1755, 0.0
    %1758 = vadd.xlane.f32.xlu0 %v1757
    %v1759 = vpop.xlane.xlu0 %1758
    %v1760 = vsel %vm49, %v1756, 0.0
    %1761 = vadd.xlane.f32.xlu0 %v1760
    %v1762 = vpop.xlane.xlu0 %1761
    %v1763 = vmul.f32 %v1759, %v56
    %v1764 = vmul.f32 %v1762, %v56
    %v1765 = vsub.f32 %v1755, %v1763
    %v1766 = vsub.f32 %v1756, %v1764
    %v1767 = vmul.f32 %v1765, %v1765
    %v1768 = vmul.f32 %v1766, %v1766
    %v1769 = vsel %vm49, %v1767, 0.0
    %1770 = vadd.xlane.f32.xlu0 %v1769
    %v1771 = vpop.xlane.xlu0 %1770
    %v1772 = vsel %vm49, %v1768, 0.0
    %1773 = vadd.xlane.f32.xlu0 %v1772
    %v1774 = vpop.xlane.xlu0 %1773
    %v1775 = vmul.f32 %v1771, %v56
    %v1776 = vmul.f32 %v1774, %v56
    %v1777 = vadd.f32 %v1775, 1e-12
    %v1778 = vadd.f32 %v1776, 1e-12
    %v1779 = vrsqrt.pop %v1777
    %v1780 = vrsqrt.pop %v1778
    %v1781 = vmul.f32 %v1765, %v1779
    %v1782 = vmul.f32 %v1766, %v1780
    %v1783 = vlaneseq
    %v1784 = vshrl.u32 %v1783, 7
    %v1785 = vsub.s32 6, %v1784
    %v1786 = vrot.slane %v980, %v1785
    %v1787 = vmul.f32 %v1781, %v1786
    %v1788 = vmul.f32 %v1782, %v1786
    %v1789 = vlaneseq
    %v1790 = vshrl.u32 %v1789, 7
    %v1791 = vsub.s32 7, %v1790
    %v1792 = vrot.slane %v980, %v1791
    %v1793 = vadd.f32 %v1787, %v1792
    %v1794 = vadd.f32 %v1788, %v1792
    %v1795 = vld [vmem:[#allocation2] sm:$0xff]
    %v1796 = vld [vmem:[#allocation2 + $0x8] sm:$0xf]
    %v1797 = vld [vmem:[#allocation2 + $0xc] sm:$0xff]
    %v1798 = vld [vmem:[#allocation2 + $0x14] sm:$0xf]
    %v1799 = vld [vmem:[#allocation2 + $0x18] sm:$0xff]
    %v1800 = vld [vmem:[#allocation2 + $0x20] sm:$0xf]
    %v1801 = vld [vmem:[#allocation2 + $0x24] sm:$0xff]
    %v1802 = vld [vmem:[#allocation2 + $0x2c] sm:$0xf]
    %v1803 = vpack.c.bf16 %v1794, %v1793
    %v1804 = vlaneseq
    %v1805 = vshrl.u32 %v1804, 7
    %v1806 = vsub.s32 2, %v1805
    %v1807 = vrot.slane %v44, %v1806
    %v1808 = vlaneseq
    %v1809 = vshrl.u32 %v1808, 7
    %v1810 = vsub.s32 2, %v1809
    %v1811 = vrot.slane %v45, %v1810
    %v1812 = vlaneseq
    %v1813 = vshrl.u32 %v1812, 7
    %v1814 = vsub.s32 2, %v1813
    %v1815 = vrot.slane %v46, %v1814
    %v1824 = vunpack.c.l.b16 %v1795
    %v1825 = vunpack.c.h.b16 %v1795
    %v1826 = vunpack.c.l.b16 %v1796
    %v1827 = vunpack.c.l.b16 %v1797
    %v1828 = vunpack.c.h.b16 %v1797
    %v1829 = vunpack.c.l.b16 %v1798
    %v1830 = vunpack.c.l.b16 %v1799
    %v1831 = vunpack.c.h.b16 %v1799
    %v1832 = vunpack.c.l.b16 %v1800
    %v1833 = vunpack.c.l.b16 %v1801
    %v1834 = vunpack.c.h.b16 %v1801
    %v1835 = vunpack.c.l.b16 %v1802
    %v1836 = vpack.c.b16 %v1827, %v1824
    %v1837 = vpack.c.b16 %v1828, %v1825
    %v1838 = vpack.c.b16 %v1829, %v1826
    %v1839 = vpack.c.b16 %v1833, %v1830
    %v1840 = vpack.c.b16 %v1834, %v1831
    %v1841 = vpack.c.b16 %v1835, %v1832
    %v1849 = vsel %vm49, %v1803, 0
    %1851 = vmatprep.subr.bf16.mxu0 %v1837
    %1852 = vmatpush1.bf16.msra.mxu0 %v1836
    %1853 = vmatprep.subr.bf16.mxu0 %v1840
    %1854 = vmatpush1.bf16.msra.mxu0 %v1839
    %1855 = vmatprep.subr.bf16.mxu0 0
    %1856 = vmatpush1.bf16.msra.mxu0 0
    %1857 = vmatprep.subr.bf16.mxu0 0
    %1858 = vmatpush1.bf16.msra.mxu0 0
    %1859 = vmatprep.subr.bf16.mxu0 0
    %1860 = vmatpush1.bf16.msra.mxu0 0
    %1861 = vmatprep.subr.bf16.mxu0 0
    %1862 = vmatpush1.bf16.msra.mxu0 0
    %1863 = vmatprep.subr.bf16.mxu0 0
    %1864 = vmatpush1.bf16.msra.mxu0 0
    %1865 = vmatprep.subr.bf16.mxu0 0
    %1866 = vmatpush1.bf16.msra.mxu0 0
    %1867 = vmatprep.subr.bf16.mxu0 0
    %1868 = vmatpush1.bf16.msra.mxu0 0
    %1869 = vmatprep.subr.bf16.mxu0 0
    %1870 = vmatpush1.bf16.msra.mxu0 0
    %1871 = vmatprep.subr.bf16.mxu0 0
    %1872 = vmatpush1.bf16.msra.mxu0 0
    %1873 = vmatprep.subr.bf16.mxu0 0
    %1874 = vmatpush1.bf16.msra.mxu0 0
    %1875 = vmatprep.subr.bf16.mxu0 0
    %1876 = vmatpush1.bf16.msra.mxu0 0
    %1877 = vmatprep.subr.bf16.mxu0 0
    %1878 = vmatpush1.bf16.msra.mxu0 0
    %1879 = vmatprep.subr.bf16.mxu0 0
    %1880 = vmatpush1.bf16.msra.mxu0 0
    %1881 = vmatprep.subr.bf16.mxu0 0
    %1882 = vmatpush1.bf16.msra.mxu0 0
    %1883 = vmatprep.mubr.bf16.mxu0 0
    %1884 = vmatmul.mubr.bf16.gmra.mrb[0].mxu0 %v1849
    %v1885 = vpop.f32.mrb[0].mxu0
    %v1886 = vadd.f32 %v1807, %v1885
    %v1887 = vpop.f32.mrb[0].mxu0
    %v1888 = vadd.f32 %v1811, %v1887
    %v1889 = vpop.f32.mrb[0].mxu0
    %v1890 = vadd.f32 %v1807, %v1889
    %v1891 = vpop.f32.mrb[0].mxu0
    %v1892 = vadd.f32 %v1811, %v1891
    %1893 = vdwg.mxu0
    %1894 = vmatprep.subr.bf16.mxu0 0
    %1895 = vmatpush1.bf16.msra.mxu0 %v1838
    %1896 = vmatprep.subr.bf16.mxu0 0
    %1897 = vmatpush1.bf16.msra.mxu0 %v1841
    %1898 = vmatprep.subr.bf16.mxu0 0
    %1899 = vmatpush1.bf16.msra.mxu0 0
    %1900 = vmatprep.subr.bf16.mxu0 0
    %1901 = vmatpush1.bf16.msra.mxu0 0
    %1902 = vmatprep.subr.bf16.mxu0 0
    %1903 = vmatpush1.bf16.msra.mxu0 0
    %1904 = vmatprep.subr.bf16.mxu0 0
    %1905 = vmatpush1.bf16.msra.mxu0 0
    %1906 = vmatprep.subr.bf16.mxu0 0
    %1907 = vmatpush1.bf16.msra.mxu0 0
    %1908 = vmatprep.subr.bf16.mxu0 0
    %1909 = vmatpush1.bf16.msra.mxu0 0
    %1910 = vmatprep.subr.bf16.mxu0 0
    %1911 = vmatpush1.bf16.msra.mxu0 0
    %1912 = vmatprep.subr.bf16.mxu0 0
    %1913 = vmatpush1.bf16.msra.mxu0 0
    %1914 = vmatprep.subr.bf16.mxu0 0
    %1915 = vmatpush1.bf16.msra.mxu0 0
    %1916 = vmatprep.subr.bf16.mxu0 0
    %1917 = vmatpush1.bf16.msra.mxu0 0
    %1918 = vmatprep.subr.bf16.mxu0 0
    %1919 = vmatpush1.bf16.msra.mxu0 0
    %1920 = vmatprep.subr.bf16.mxu0 0
    %1921 = vmatpush1.bf16.msra.mxu0 0
    %1922 = vmatprep.subr.bf16.mxu0 0
    %1923 = vmatpush1.bf16.msra.mxu0 0
    %1924 = vmatprep.subr.bf16.mxu0 0
    %1925 = vmatpush1.bf16.msra.mxu0 0
    %1926 = vmatprep.mubr.bf16.mxu0 0
    %1927 = vmatmul.mubr.bf16.gmra.mrb[0].mxu0 %v1849
    %v1928 = vpop.f32.mrb[0].mxu0
    %v1929 = vadd.f32 %v1815, %v1928
    %v1930 = vpop.f32.mrb[0].mxu0
    %v1931 = vpop.f32.mrb[0].mxu0
    %v1932 = vadd.f32 %v1815, %v1931
    %v1933 = vpop.f32.mrb[0].mxu0
    %1934 = vdwg.mxu0
    %v1935 = vmax.f32 %v1886, 0.0
    %v1936 = vmax.f32 %v1888, 0.0
    %v1937 = vmax.f32 %v1929, 0.0
    %v1938 = vmax.f32 %v1890, 0.0
    %v1939 = vmax.f32 %v1892, 0.0
    %v1940 = vmax.f32 %v1932, 0.0
    %v1941 = vld [vmem:[#allocation2 + $0x30] sm:$0xf]
    %v1942 = vld [vmem:[#allocation2 + $0x3c] sm:$0xf]
    %v1943 = vld [vmem:[#allocation2 + $0x48] sm:$0xf]
    %v1944 = vld [vmem:[#allocation2 + $0x54] sm:$0xf]
    %v1945 = vld [vmem:[#allocation2 + $0x60] sm:$0xf]
    %v1946 = vld [vmem:[#allocation2 + $0x6c] sm:$0xf]
    %v1947 = vld [vmem:[#allocation2 + $0x78] sm:$0xf]
    %v1948 = vld [vmem:[#allocation2 + $0x84] sm:$0xf]
    %v1949 = vld [vmem:[#allocation2 + $0x90] sm:$0xf]
    %v1950 = vld [vmem:[#allocation2 + $0x9c] sm:$0xf]
    %v1951 = vld [vmem:[#allocation2 + $0xa8] sm:$0xf]
    %v1952 = vld [vmem:[#allocation2 + $0xb4] sm:$0xf]
    %v1953 = vld [vmem:[#allocation2 + $0xc0] sm:$0xf]
    %v1954 = vld [vmem:[#allocation2 + $0xcc] sm:$0xf]
    %v1955 = vld [vmem:[#allocation2 + $0xd8] sm:$0xf]
    %v1956 = vld [vmem:[#allocation2 + $0xe4] sm:$0xf]
    %v1957 = vld [vmem:[#allocation2 + $0xf0] sm:$0xf]
    %v1958 = vld [vmem:[#allocation2 + $0xfc] sm:$0xf]
    %v1959 = vld [vmem:[#allocation2 + $0x108] sm:$0xf]
    %v1960 = vld [vmem:[#allocation2 + $0x114] sm:$0xf]
    %v1961 = vld [vmem:[#allocation2 + $0x120] sm:$0xf]
    %v1962 = vld [vmem:[#allocation2 + $0x12c] sm:$0xf]
    %v1963 = vld [vmem:[#allocation2 + $0x138] sm:$0xf]
    %v1964 = vld [vmem:[#allocation2 + $0x144] sm:$0xf]
    %v1965 = vld [vmem:[#allocation2 + $0x150] sm:$0xf]
    %v1966 = vld [vmem:[#allocation2 + $0x15c] sm:$0xf]
    %v1967 = vld [vmem:[#allocation2 + $0x168] sm:$0xf]
    %v1968 = vld [vmem:[#allocation2 + $0x174] sm:$0xf]
    %v1969 = vld [vmem:[#allocation2 + $0x180] sm:$0xf]
    %v1970 = vld [vmem:[#allocation2 + $0x18c] sm:$0xf]
    %v1971 = vld [vmem:[#allocation2 + $0x198] sm:$0xf]
    %v1972 = vld [vmem:[#allocation2 + $0x1a4] sm:$0xf]
    %v1973 = vld [vmem:[#allocation2 + $0x1b0] sm:$0xf]
    %v1974 = vld [vmem:[#allocation2 + $0x1bc] sm:$0xf]
    %v1975 = vld [vmem:[#allocation2 + $0x1c8] sm:$0xf]
    %v1976 = vld [vmem:[#allocation2 + $0x1d4] sm:$0xf]
    %v1977 = vld [vmem:[#allocation2 + $0x1e0] sm:$0xf]
    %v1978 = vld [vmem:[#allocation2 + $0x1ec] sm:$0xf]
    %v1979 = vld [vmem:[#allocation2 + $0x1f8] sm:$0xf]
    %v1980 = vld [vmem:[#allocation2 + $0x204] sm:$0xf]
    %v1981 = vld [vmem:[#allocation2 + $0x210] sm:$0xf]
    %v1982 = vld [vmem:[#allocation2 + $0x21c] sm:$0xf]
    %v1983 = vld [vmem:[#allocation2 + $0x228] sm:$0xf]
    %v1984 = vld [vmem:[#allocation2 + $0x234] sm:$0xf]
    %v1985 = vld [vmem:[#allocation2 + $0x240] sm:$0xf]
    %v1986 = vld [vmem:[#allocation2 + $0x24c] sm:$0xf]
    %v1987 = vld [vmem:[#allocation2 + $0x258] sm:$0xf]
    %v1988 = vld [vmem:[#allocation2 + $0x264] sm:$0xf]
    %v1989 = vpack.c.bf16 %v1938, %v1935
    %v1990 = vpack.c.bf16 %v1939, %v1936
    %v1991 = vpack.c.bf16 %v1940, %v1937
    %v1992 = vlaneseq
    %v1993 = vshrl.u32 %v1992, 7
    %v1994 = vsub.s32 3, %v1993
    %v1995 = vrot.slane %v44, %v1994
    %v2044 = vunpack.c.l.b16 %v1941
    %v2045 = vunpack.c.l.b16 %v1942
    %v2046 = vunpack.c.l.b16 %v1943
    %v2047 = vunpack.c.l.b16 %v1944
    %v2048 = vunpack.c.l.b16 %v1945
    %v2049 = vunpack.c.l.b16 %v1946
    %v2050 = vunpack.c.l.b16 %v1947
    %v2051 = vunpack.c.l.b16 %v1948
    %v2052 = vunpack.c.l.b16 %v1949
    %v2053 = vunpack.c.l.b16 %v1950
    %v2054 = vunpack.c.l.b16 %v1951
    %v2055 = vunpack.c.l.b16 %v1952
    %v2056 = vunpack.c.l.b16 %v1953
    %v2057 = vunpack.c.l.b16 %v1954
    %v2058 = vunpack.c.l.b16 %v1955
    %v2059 = vunpack.c.l.b16 %v1956
    %v2060 = vunpack.c.l.b16 %v1957
    %v2061 = vunpack.c.l.b16 %v1958
    %v2062 = vunpack.c.l.b16 %v1959
    %v2063 = vunpack.c.l.b16 %v1960
    %v2064 = vunpack.c.l.b16 %v1961
    %v2065 = vunpack.c.l.b16 %v1962
    %v2066 = vunpack.c.l.b16 %v1963
    %v2067 = vunpack.c.l.b16 %v1964
    %v2068 = vunpack.c.l.b16 %v1965
    %v2069 = vunpack.c.l.b16 %v1966
    %v2070 = vunpack.c.l.b16 %v1967
    %v2071 = vunpack.c.l.b16 %v1968
    %v2072 = vunpack.c.l.b16 %v1969
    %v2073 = vunpack.c.l.b16 %v1970
    %v2074 = vunpack.c.l.b16 %v1971
    %v2075 = vunpack.c.l.b16 %v1972
    %v2076 = vunpack.c.l.b16 %v1973
    %v2077 = vunpack.c.l.b16 %v1974
    %v2078 = vunpack.c.l.b16 %v1975
    %v2079 = vunpack.c.l.b16 %v1976
    %v2080 = vunpack.c.l.b16 %v1977
    %v2081 = vunpack.c.l.b16 %v1978
    %v2082 = vunpack.c.l.b16 %v1979
    %v2083 = vunpack.c.l.b16 %v1980
    %v2084 = vunpack.c.l.b16 %v1981
    %v2085 = vunpack.c.l.b16 %v1982
    %v2086 = vunpack.c.l.b16 %v1983
    %v2087 = vunpack.c.l.b16 %v1984
    %v2088 = vunpack.c.l.b16 %v1985
    %v2089 = vunpack.c.l.b16 %v1986
    %v2090 = vunpack.c.l.b16 %v1987
    %v2091 = vunpack.c.l.b16 %v1988
    %v2092 = vpack.c.b16 %v2045, %v2044
    %v2093 = vpack.c.b16 %v2047, %v2046
    %v2094 = vpack.c.b16 %v2049, %v2048
    %v2095 = vpack.c.b16 %v2051, %v2050
    %v2096 = vpack.c.b16 %v2053, %v2052
    %v2097 = vpack.c.b16 %v2055, %v2054
    %v2098 = vpack.c.b16 %v2057, %v2056
    %v2099 = vpack.c.b16 %v2059, %v2058
    %v2100 = vpack.c.b16 %v2061, %v2060
    %v2101 = vpack.c.b16 %v2063, %v2062
    %v2102 = vpack.c.b16 %v2065, %v2064
    %v2103 = vpack.c.b16 %v2067, %v2066
    %v2104 = vpack.c.b16 %v2069, %v2068
    %v2105 = vpack.c.b16 %v2071, %v2070
    %v2106 = vpack.c.b16 %v2073, %v2072
    %v2107 = vpack.c.b16 %v2075, %v2074
    %v2108 = vpack.c.b16 %v2077, %v2076
    %v2109 = vpack.c.b16 %v2079, %v2078
    %v2110 = vpack.c.b16 %v2081, %v2080
    %v2111 = vpack.c.b16 %v2083, %v2082
    %v2112 = vpack.c.b16 %v2085, %v2084
    %v2113 = vpack.c.b16 %v2087, %v2086
    %v2114 = vpack.c.b16 %v2089, %v2088
    %v2115 = vpack.c.b16 %v2091, %v2090
    %2140 = vmatprep.subr.bf16.mxu0 0
    %2141 = vmatpush1.bf16.msra.mxu0 %v2092
    %2142 = vmatprep.subr.bf16.mxu0 0
    %2143 = vmatpush1.bf16.msra.mxu0 %v2093
    %2144 = vmatprep.subr.bf16.mxu0 0
    %2145 = vmatpush1.bf16.msra.mxu0 %v2094
    %2146 = vmatprep.subr.bf16.mxu0 0
    %2147 = vmatpush1.bf16.msra.mxu0 %v2095
    %2148 = vmatprep.subr.bf16.mxu0 0
    %2149 = vmatpush1.bf16.msra.mxu0 %v2096
    %2150 = vmatprep.subr.bf16.mxu0 0
    %2151 = vmatpush1.bf16.msra.mxu0 %v2097
    %2152 = vmatprep.subr.bf16.mxu0 0
    %2153 = vmatpush1.bf16.msra.mxu0 %v2098
    %2154 = vmatprep.subr.bf16.mxu0 0
    %2155 = vmatpush1.bf16.msra.mxu0 %v2099
    %2156 = vmatprep.subr.bf16.mxu0 0
    %2157 = vmatpush1.bf16.msra.mxu0 %v2100
    %2158 = vmatprep.subr.bf16.mxu0 0
    %2159 = vmatpush1.bf16.msra.mxu0 %v2101
    %2160 = vmatprep.subr.bf16.mxu0 0
    %2161 = vmatpush1.bf16.msra.mxu0 %v2102
    %2162 = vmatprep.subr.bf16.mxu0 0
    %2163 = vmatpush1.bf16.msra.mxu0 %v2103
    %2164 = vmatprep.subr.bf16.mxu0 0
    %2165 = vmatpush1.bf16.msra.mxu0 %v2104
    %2166 = vmatprep.subr.bf16.mxu0 0
    %2167 = vmatpush1.bf16.msra.mxu0 %v2105
    %2168 = vmatprep.subr.bf16.mxu0 0
    %2169 = vmatpush1.bf16.msra.mxu0 %v2106
    %2170 = vmatprep.subr.bf16.mxu0 0
    %2171 = vmatpush1.bf16.msra.mxu0 %v2107
    %2172 = vmatprep.mubr.bf16.mxu0 %v1990
    %2173 = vmatmul.mubr.bf16.gmra.mrb[0].mxu0 %v1989
    %v2174 = vpop.f32.mrb[0].mxu0
    %v2175 = vadd.f32 %v1995, %v2174
    %v2176 = vpop.f32.mrb[0].mxu0
    %v2177 = vpop.f32.mrb[0].mxu0
    %v2178 = vadd.f32 %v1995, %v2177
    %v2179 = vpop.f32.mrb[0].mxu0
    %2180 = vdwg.mxu0
    %2181 = vmatprep.subr.bf16.mxu0 0
    %2182 = vmatpush1.bf16.msra.mxu0 %v2108
    %2183 = vmatprep.subr.bf16.mxu0 0
    %2184 = vmatpush1.bf16.msra.mxu0 %v2109
    %2185 = vmatprep.subr.bf16.mxu0 0
    %2186 = vmatpush1.bf16.msra.mxu0 %v2110
    %2187 = vmatprep.subr.bf16.mxu0 0
    %2188 = vmatpush1.bf16.msra.mxu0 %v2111
    %2189 = vmatprep.subr.bf16.mxu0 0
    %2190 = vmatpush1.bf16.msra.mxu0 %v2112
    %2191 = vmatprep.subr.bf16.mxu0 0
    %2192 = vmatpush1.bf16.msra.mxu0 %v2113
    %2193 = vmatprep.subr.bf16.mxu0 0
    %2194 = vmatpush1.bf16.msra.mxu0 %v2114
    %2195 = vmatprep.subr.bf16.mxu0 0
    %2196 = vmatpush1.bf16.msra.mxu0 %v2115
    %2197 = vmatprep.subr.bf16.mxu0 0
    %2198 = vmatpush1.bf16.msra.mxu0 0
    %2199 = vmatprep.subr.bf16.mxu0 0
    %2200 = vmatpush1.bf16.msra.mxu0 0
    %2201 = vmatprep.subr.bf16.mxu0 0
    %2202 = vmatpush1.bf16.msra.mxu0 0
    %2203 = vmatprep.subr.bf16.mxu0 0
    %2204 = vmatpush1.bf16.msra.mxu0 0
    %2205 = vmatprep.subr.bf16.mxu0 0
    %2206 = vmatpush1.bf16.msra.mxu0 0
    %2207 = vmatprep.subr.bf16.mxu0 0
    %2208 = vmatpush1.bf16.msra.mxu0 0
    %2209 = vmatprep.subr.bf16.mxu0 0
    %2210 = vmatpush1.bf16.msra.mxu0 0
    %2211 = vmatprep.subr.bf16.mxu0 0
    %2212 = vmatpush1.bf16.msra.mxu0 0
    %2213 = vmatprep.mubr.bf16.mxu0 0
    %2214 = vmatmul.mubr.bf16.gmra.mrb[0].mxu0 %v1991
    %v2215 = vpop.f32.mrb[0].mxu0
    %v2216 = vadd.f32 %v2175, %v2215
    %v2217 = vpop.f32.mrb[0].mxu0
    %v2218 = vpop.f32.mrb[0].mxu0
    %v2219 = vadd.f32 %v2178, %v2218
    %v2220 = vpop.f32.mrb[0].mxu0
    %2221 = vdwg.mxu0
    %v2222 = vmax.f32 %v2216, 0.0
    %v2223 = vmax.f32 %v2219, 0.0
    %v2224 = vld [vmem:[#allocation2 + $0x270] sm:$0xf]
    %v2225 = vld [vmem:[#allocation2 + $0x27c] sm:$0xf]
    %v2226 = vld [vmem:[#allocation2 + $0x288] sm:$0xf]
    %v2227 = vld [vmem:[#allocation2 + $0x294] sm:$0xf]
    %v2228 = vld [vmem:[#allocation2 + $0x2a0] sm:$0xf]
    %v2229 = vld [vmem:[#allocation2 + $0x2ac] sm:$0xf]
    %v2230 = vld [vmem:[#allocation2 + $0x2b8] sm:$0xf]
    %v2231 = vld [vmem:[#allocation2 + $0x2c4] sm:$0xf]
    %v2232 = vld [vmem:[#allocation2 + $0x2d0] sm:$0xf]
    %v2233 = vld [vmem:[#allocation2 + $0x2dc] sm:$0xf]
    %v2234 = vld [vmem:[#allocation2 + $0x2e8] sm:$0xf]
    %v2235 = vld [vmem:[#allocation2 + $0x2f4] sm:$0xf]
    %v2236 = vld [vmem:[#allocation2 + $0x300] sm:$0xf]
    %v2237 = vld [vmem:[#allocation2 + $0x30c] sm:$0xf]
    %v2238 = vld [vmem:[#allocation2 + $0x318] sm:$0xf]
    %v2239 = vld [vmem:[#allocation2 + $0x324] sm:$0xf]
    %v2240 = vpack.c.bf16 %v2223, %v2222
    %v2241 = vlaneseq
    %v2242 = vshrl.u32 %v2241, 7
    %v2243 = vsub.s32 4, %v2242
    %v2244 = vrot.slane %v44, %v2243
    %v2261 = vunpack.c.l.b16 %v2224
    %v2262 = vunpack.c.l.b16 %v2225
    %v2263 = vunpack.c.l.b16 %v2226
    %v2264 = vunpack.c.l.b16 %v2227
    %v2265 = vunpack.c.l.b16 %v2228
    %v2266 = vunpack.c.l.b16 %v2229
    %v2267 = vunpack.c.l.b16 %v2230
    %v2268 = vunpack.c.l.b16 %v2231
    %v2269 = vunpack.c.l.b16 %v2232
    %v2270 = vunpack.c.l.b16 %v2233
    %v2271 = vunpack.c.l.b16 %v2234
    %v2272 = vunpack.c.l.b16 %v2235
    %v2273 = vunpack.c.l.b16 %v2236
    %v2274 = vunpack.c.l.b16 %v2237
    %v2275 = vunpack.c.l.b16 %v2238
    %v2276 = vunpack.c.l.b16 %v2239
    %v2277 = vpack.c.b16 %v2262, %v2261
    %v2278 = vpack.c.b16 %v2264, %v2263
    %v2279 = vpack.c.b16 %v2266, %v2265
    %v2280 = vpack.c.b16 %v2268, %v2267
    %v2281 = vpack.c.b16 %v2270, %v2269
    %v2282 = vpack.c.b16 %v2272, %v2271
    %v2283 = vpack.c.b16 %v2274, %v2273
    %v2284 = vpack.c.b16 %v2276, %v2275
    %2293 = vmatprep.subr.bf16.mxu0 0
    %2294 = vmatpush1.bf16.msra.mxu0 %v2277
    %2295 = vmatprep.subr.bf16.mxu0 0
    %2296 = vmatpush1.bf16.msra.mxu0 %v2278
    %2297 = vmatprep.subr.bf16.mxu0 0
    %2298 = vmatpush1.bf16.msra.mxu0 %v2279
    %2299 = vmatprep.subr.bf16.mxu0 0
    %2300 = vmatpush1.bf16.msra.mxu0 %v2280
    %2301 = vmatprep.subr.bf16.mxu0 0
    %2302 = vmatpush1.bf16.msra.mxu0 %v2281
    %2303 = vmatprep.subr.bf16.mxu0 0
    %2304 = vmatpush1.bf16.msra.mxu0 %v2282
    %2305 = vmatprep.subr.bf16.mxu0 0
    %2306 = vmatpush1.bf16.msra.mxu0 %v2283
    %2307 = vmatprep.subr.bf16.mxu0 0
    %2308 = vmatpush1.bf16.msra.mxu0 %v2284
    %2309 = vmatprep.subr.bf16.mxu0 0
    %2310 = vmatpush1.bf16.msra.mxu0 0
    %2311 = vmatprep.subr.bf16.mxu0 0
    %2312 = vmatpush1.bf16.msra.mxu0 0
    %2313 = vmatprep.subr.bf16.mxu0 0
    %2314 = vmatpush1.bf16.msra.mxu0 0
    %2315 = vmatprep.subr.bf16.mxu0 0
    %2316 = vmatpush1.bf16.msra.mxu0 0
    %2317 = vmatprep.subr.bf16.mxu0 0
    %2318 = vmatpush1.bf16.msra.mxu0 0
    %2319 = vmatprep.subr.bf16.mxu0 0
    %2320 = vmatpush1.bf16.msra.mxu0 0
    %2321 = vmatprep.subr.bf16.mxu0 0
    %2322 = vmatpush1.bf16.msra.mxu0 0
    %2323 = vmatprep.subr.bf16.mxu0 0
    %2324 = vmatpush1.bf16.msra.mxu0 0
    %2325 = vmatprep.mubr.bf16.mxu0 0
    %2326 = vmatmul.mubr.bf16.gmra.mrb[0].mxu0 %v2240
    %v2327 = vpop.f32.mrb[0].mxu0
    %v2328 = vadd.f32 %v2244, %v2327
    %v2329 = vpop.f32.mrb[0].mxu0
    %v2330 = vpop.f32.mrb[0].mxu0
    %v2331 = vadd.f32 %v2244, %v2330
    %v2332 = vpop.f32.mrb[0].mxu0
    %2333 = vdwg.mxu0
    %v2334 = vmax.f32 %v2328, 0.0
    %v2335 = vmax.f32 %v2331, 0.0
    %v2336 = vld [vmem:[#allocation2 + $0x330] sm:$0xf]
    %v2337 = vld [vmem:[#allocation2 + $0x33c] sm:$0xf]
    %v2338 = vld [vmem:[#allocation2 + $0x348] sm:$0xf]
    %v2339 = vld [vmem:[#allocation2 + $0x354] sm:$0xf]
    %v2340 = vld [vmem:[#allocation2 + $0x360] sm:$0xf]
    %v2341 = vld [vmem:[#allocation2 + $0x36c] sm:$0xf]
    %v2342 = vld [vmem:[#allocation2 + $0x378] sm:$0xf]
    %v2343 = vld [vmem:[#allocation2 + $0x384] sm:$0xf]
    %v2344 = vld [vmem:[#allocation2 + $0x390] sm:$0xf]
    %v2345 = vld [vmem:[#allocation2 + $0x39c] sm:$0xf]
    %v2346 = vld [vmem:[#allocation2 + $0x3a8] sm:$0xf]
    %v2347 = vld [vmem:[#allocation2 + $0x3b4] sm:$0xf]
    %v2348 = vld [vmem:[#allocation2 + $0x3c0] sm:$0xf]
    %v2349 = vld [vmem:[#allocation2 + $0x3cc] sm:$0xf]
    %v2350 = vld [vmem:[#allocation2 + $0x3d8] sm:$0xf]
    %v2351 = vld [vmem:[#allocation2 + $0x3e4] sm:$0xf]
    %v2352 = vpack.c.bf16 %v2335, %v2334
    %v2353 = vlaneseq
    %v2354 = vshrl.u32 %v2353, 7
    %v2355 = vsub.s32 5, %v2354
    %v2356 = vrot.slane %v44, %v2355
    %v2373 = vunpack.c.l.b16 %v2336
    %v2374 = vunpack.c.l.b16 %v2337
    %v2375 = vunpack.c.l.b16 %v2338
    %v2376 = vunpack.c.l.b16 %v2339
    %v2377 = vunpack.c.l.b16 %v2340
    %v2378 = vunpack.c.l.b16 %v2341
    %v2379 = vunpack.c.l.b16 %v2342
    %v2380 = vunpack.c.l.b16 %v2343
    %v2381 = vunpack.c.l.b16 %v2344
    %v2382 = vunpack.c.l.b16 %v2345
    %v2383 = vunpack.c.l.b16 %v2346
    %v2384 = vunpack.c.l.b16 %v2347
    %v2385 = vunpack.c.l.b16 %v2348
    %v2386 = vunpack.c.l.b16 %v2349
    %v2387 = vunpack.c.l.b16 %v2350
    %v2388 = vunpack.c.l.b16 %v2351
    %v2389 = vpack.c.b16 %v2374, %v2373
    %v2390 = vpack.c.b16 %v2376, %v2375
    %v2391 = vpack.c.b16 %v2378, %v2377
    %v2392 = vpack.c.b16 %v2380, %v2379
    %v2393 = vpack.c.b16 %v2382, %v2381
    %v2394 = vpack.c.b16 %v2384, %v2383
    %v2395 = vpack.c.b16 %v2386, %v2385
    %v2396 = vpack.c.b16 %v2388, %v2387
    %2405 = vmatprep.subr.bf16.mxu0 0
    %2406 = vmatpush1.bf16.msra.mxu0 %v2389
    %2407 = vmatprep.subr.bf16.mxu0 0
    %2408 = vmatpush1.bf16.msra.mxu0 %v2390
    %2409 = vmatprep.subr.bf16.mxu0 0
    %2410 = vmatpush1.bf16.msra.mxu0 %v2391
    %2411 = vmatprep.subr.bf16.mxu0 0
    %2412 = vmatpush1.bf16.msra.mxu0 %v2392
    %2413 = vmatprep.subr.bf16.mxu0 0
    %2414 = vmatpush1.bf16.msra.mxu0 %v2393
    %2415 = vmatprep.subr.bf16.mxu0 0
    %2416 = vmatpush1.bf16.msra.mxu0 %v2394
    %2417 = vmatprep.subr.bf16.mxu0 0
    %2418 = vmatpush1.bf16.msra.mxu0 %v2395
    %2419 = vmatprep.subr.bf16.mxu0 0
    %2420 = vmatpush1.bf16.msra.mxu0 %v2396
    %2421 = vmatprep.subr.bf16.mxu0 0
    %2422 = vmatpush1.bf16.msra.mxu0 0
    %2423 = vmatprep.subr.bf16.mxu0 0
    %2424 = vmatpush1.bf16.msra.mxu0 0
    %2425 = vmatprep.subr.bf16.mxu0 0
    %2426 = vmatpush1.bf16.msra.mxu0 0
    %2427 = vmatprep.subr.bf16.mxu0 0
    %2428 = vmatpush1.bf16.msra.mxu0 0
    %2429 = vmatprep.subr.bf16.mxu0 0
    %2430 = vmatpush1.bf16.msra.mxu0 0
    %2431 = vmatprep.subr.bf16.mxu0 0
    %2432 = vmatpush1.bf16.msra.mxu0 0
    %2433 = vmatprep.subr.bf16.mxu0 0
    %2434 = vmatpush1.bf16.msra.mxu0 0
    %2435 = vmatprep.subr.bf16.mxu0 0
    %2436 = vmatpush1.bf16.msra.mxu0 0
    %2437 = vmatprep.mubr.bf16.mxu0 0
    %2438 = vmatmul.mubr.bf16.gmra.mrb[0].mxu0 %v2352
    %v2439 = vpop.f32.mrb[0].mxu0
    %v2440 = vadd.f32 %v2356, %v2439
    %v2441 = vpop.f32.mrb[0].mxu0
    %v2442 = vpop.f32.mrb[0].mxu0
    %v2443 = vadd.f32 %v2356, %v2442
    %v2444 = vpop.f32.mrb[0].mxu0
    %2445 = vdwg.mxu0
    %2446 = vst [vmem:[%s8] sm:$0xff] %v2440
    %2447 = vst [vmem:[%s8 + $0x8] sm:$0xff] %v2443
    // Predicated region
    $region38: #{bert_classifier_forward.1} parent=1 // pred_check
      _
    $region39: #{bert_classifier_forward.1} parent=1 // pred_check_branch
      %2449 = sbr.rel (0) target = $region41
    $region40: #{bert_classifier_forward.1} parent=1 // pred_region
      _
    $region41: #{bert_classifier_forward.1} parent=1 // pred_fallthru
      _
    // Predicated region
    $region42: #{bert_classifier_forward.1} parent=1 // pred_check
      _
    $region43: #{bert_classifier_forward.1} parent=1 // pred_check_branch
      %2451 = sbr.rel (0) target = $region45
    $region44: #{bert_classifier_forward.1} parent=1 // pred_region
      _
    $region45: #{bert_classifier_forward.1} parent=1 // pred_fallthru
      _
    %2452 = vsyncpa [#allocation3], 1

</llo_original>
